<compile_context>
chip_gen: v7x
topology: tpu7x:2x2x1
jax: 0.10.0
libtpu: 0.0.40
codegen_flags: <defaults>
</compile_context>

<pallas_src>
import jax
import jax.numpy as jnp
from jax import lax
from jax.experimental import pallas as pl
from jax.experimental.pallas import tpu as pltpu

D_IN, H1, H2, D_OUT = 2, 10, 10, 2
MAX_TILE_R = 256          # 128-lane rows per grid step (256 -> 32768 samples / 256 KiB x-block)


def _elu(z):
    return jnp.where(z > 0, z, jnp.exp(z) - 1.0)


def _mlp(x0, x1, w1, b1, w2, b2, w3, b3):
    """2->10->10->2 ELU MLP applied element-wise over (tile_r, 128) sample tiles.

    x0, x1: (tile_r, 128) f32 arrays holding feature 0 / feature 1 of each sample.
    w*/b*: Python lists of traced scalars (already read from SMEM).
    Fully unrolled scalar*vector multiply-adds -> VPU only, no MXU, no cross-lane ops.
    """
    # layer 1: 2 -> 10
    h = []
    for j in range(H1):
        z = x0 * w1[0 * H1 + j] + x1 * w1[1 * H1 + j] + b1[j]
        h.append(_elu(z))
    # layer 2: 10 -> 10
    g = []
    for j in range(H2):
        z = h[0] * w2[0 * H2 + j]
        for i in range(1, H1):
            z = z + h[i] * w2[i * H2 + j]
        g.append(_elu(z + b2[j]))
    # layer 3: 10 -> 2
    y = []
    for j in range(D_OUT):
        z = g[0] * w3[0 * D_OUT + j]
        for i in range(1, H2):
            z = z + g[i] * w3[i * D_OUT + j]
        y.append(_elu(z + b3[j]))
    return y[0], y[1]


def _mod_kernel(x_ref, n_ref, w1_ref, b1_ref, w2_ref, b2_ref, w3_ref, b3_ref,
                y_ref, sum_ref, sq_ref):
    """MLP + un-normalized lane-dense output + per-lane/per-core stats accumulation."""
    c = pl.program_id(0)                    # core-split axis ("parallel")
    t = pl.program_id(1)                    # row-tile axis  ("arbitrary", reduction)
    t_per_core = pl.num_programs(1)
    tile_r = sum_ref.shape[0]

    @pl.when(t == 0)
    def _():
        sum_ref[...] = jnp.zeros_like(sum_ref)
        sq_ref[...] = jnp.zeros_like(sq_ref)

    # Hoist all SMEM weight/bias scalar reads once per kernel invocation.
    w1 = [w1_ref[k] for k in range(D_IN * H1)]
    b1 = [b1_ref[k] for k in range(H1)]
    w2 = [w2_ref[k] for k in range(H1 * H2)]
    b2 = [b2_ref[k] for k in range(H2)]
    w3 = [w3_ref[k] for k in range(H2 * D_OUT)]
    b3 = [b3_ref[k] for k in range(D_OUT)]

    x0 = x_ref[0, :, :]
    x1 = x_ref[1, :, :]
    y0, y1 = _mlp(x0, x1, w1, b1, w2, b2, w3, b3)

    # Un-normalized outputs: full-vreg, lane-dense, unmasked stores.
    y_ref[0, :, :] = y0
    y_ref[1, :, :] = y1

    # Per-lane partial sum / sum-of-squares; padded samples masked out (cheap, ~3%).
    base = (c * t_per_core + t) * (tile_r * 128)
    rows = lax.broadcasted_iota(jnp.int32, (tile_r, 128), 0)
    lanes = lax.broadcasted_iota(jnp.int32, (tile_r, 128), 1)
    valid = (base + rows * 128 + lanes) < n_ref[0]
    sum_ref[...] += jnp.where(valid, y0 + y1, 0.0)
    sq_ref[...] += jnp.where(valid, y0 * y0 + y1 * y1, 0.0)


def _choose_grid(n):
    r = (n + 127) // 128                          # number of 128-lane rows needed
    if r >= MAX_TILE_R:
        tile_r = MAX_TILE_R
    else:
        tile_r = max(8, ((r + 7) // 8) * 8)       # sublane-aligned
    num_tiles = (r + tile_r - 1) // tile_r
    n_cores = 2 if num_tiles > 1 else 1           # v7x: split the VALU-bound pass over 2 TCs
    t_per_core = (num_tiles + n_cores - 1) // n_cores
    r_pad = n_cores * t_per_core * tile_r
    return tile_r, n_cores, t_per_core, r_pad


@jax.jit
def modulator_forward(x, params):
    """x: [B, L, 2] float32. Returns [B, L, 2] float32."""
    B, L, D = x.shape
    if D != D_IN:
        raise ValueError("modulator expects feature dim == 2")
    n = B * L
    tile_r, n_cores, t_per_core, r_pad = _choose_grid(n)
    n_pad = r_pad * 128

    w1, b1, w2, b2, w3, b3 = params
    w1f = w1.reshape(-1).astype(jnp.float32)      # row-major [in, out] flatten
    w2f = w2.reshape(-1).astype(jnp.float32)
    w3f = w3.reshape(-1).astype(jnp.float32)
    b1f = b1.astype(jnp.float32)
    b2f = b2.astype(jnp.float32)
    b3f = b3.astype(jnp.float32)

    # Lane-dense transposed layout: (2, n) -> pad tail -> (2, r_pad, 128).
    x2 = x.reshape(n, D).astype(jnp.float32).T
    xt = jnp.pad(x2, ((0, 0), (0, n_pad - n))).reshape(2, r_pad, 128)

    smem = pl.BlockSpec(memory_space=pltpu.MemorySpace.SMEM)  # weights/scalars, DMA'd once
    tile_spec = pl.BlockSpec((2, tile_r, 128), lambda c, t: (0, c * t_per_core + t, 0))
    n_arr = jnp.array([n], jnp.int32)

    y, sum_p, sq_p = pl.pallas_call(
        _mod_kernel,
        grid=(n_cores, t_per_core),
        in_specs=[tile_spec, smem, smem, smem, smem, smem, smem, smem],
        out_specs=(tile_spec,                                              # un-normalized y
                   pl.BlockSpec((tile_r, 128), lambda c, t: (c, 0)),       # per-core sum
                   pl.BlockSpec((tile_r, 128), lambda c, t: (c, 0))),      # per-core sumsq
        out_shape=(jax.ShapeDtypeStruct((2, r_pad, 128), jnp.float32),
                   jax.ShapeDtypeStruct((n_cores * tile_r, 128), jnp.float32),
                   jax.ShapeDtypeStruct((n_cores * tile_r, 128), jnp.float32)),
        compiler_params=pltpu.CompilerParams(
            dimension_semantics=("parallel", "arbitrary")),
    )(xt, n_arr, w1f, b1f, w2f, b2f, w3f, b3f)

    # Finish the statistics (tiny reductions), torch.std uses ddof=1.
    cnt = jnp.float32(n * D_OUT)
    mean = jnp.sum(sum_p) / cnt
    # Note: jnp.maximum guards the (degenerate) n*D == 1 case where torch.std would be NaN.
    var = (jnp.sum(sq_p) - cnt * mean * mean) / jnp.maximum(cnt - 1.0, 1.0)
    inv_std = lax.rsqrt(var)

    # Normalize fused with the mandatory output de-layout (slice + transpose) in XLA.
    yv = y.reshape(2, n_pad)[:, :n]
    return ((yv - mean) * inv_std).T.reshape(B, L, D)


def init_params(key):
    """Deterministic init mirroring torch.nn.Linear shapes (stored as [in, out])."""
    dims = [(2, 10), (10, 10), (10, 2)]
    params = []
    for i, (d_in, d_out) in enumerate(dims):
        kw, kb = jax.random.split(jax.random.fold_in(key, i))
        bound = 1.0 / (d_in ** 0.5)
        w = jax.random.uniform(kw, (d_in, d_out), jnp.float32, -bound, bound)
        b = jax.random.uniform(kb, (d_out,), jnp.float32, -bound, bound)
        params += [w, b]
    return tuple(params)


def reference_forward(x, params):
    w1, b1, w2, b2, w3, b3 = params
    y = _elu(x @ w1 + b1)
    y = _elu(y @ w2 + b2)
    y = _elu(y @ w3 + b3)
    mean = jnp.mean(y)
    std = jnp.sqrt(jnp.sum((y - mean) ** 2) / (y.size - 1))
    return (y - mean) / std


if __name__ == "__main__":
    key = jax.random.PRNGKey(0)
    k_x, k_p, k_x2 = jax.random.split(key, 3)
    params = init_params(k_p)

    # Small shape: single tile, single core-group, exercises the masked-padding path.
    B, L = 2, 8
    x = jax.random.normal(k_x, (B, L, 2), jnp.float32)
    out = jax.block_until_ready(modulator_forward(x, params))
    ref = reference_forward(x, params)
    assert out.shape == (B, L, 2)
    assert jnp.allclose(out, ref, atol=1e-5, rtol=1e-5), "mismatch vs reference (small)"

    # Larger shape: multiple tiles + 2-core split + one fully-padded tile + partial tile.
    x2 = jax.random.normal(k_x2, (4, 16500, 2), jnp.float32)
    out2 = jax.block_until_ready(modulator_forward(x2, params))
    ref2 = reference_forward(x2, params)
    assert out2.shape == (4, 16500, 2)
    assert jnp.allclose(out2, ref2, atol=1e-4, rtol=1e-4), "mismatch vs reference (large)"

    print("KERNEL_OK")
</pallas_src>

<mosaic_0001>
module attributes {stable_mosaic.version = 11 : i64} {
  func.func @_mod_kernel(%arg0: i32, %arg1: i32, %arg2: memref<2x8x128xf32, #tpu.memory_space<vmem>>, %arg3: memref<1xi32, #tpu.memory_space<smem>>, %arg4: memref<20xf32, #tpu.memory_space<smem>>, %arg5: memref<10xf32, #tpu.memory_space<smem>>, %arg6: memref<100xf32, #tpu.memory_space<smem>>, %arg7: memref<10xf32, #tpu.memory_space<smem>>, %arg8: memref<20xf32, #tpu.memory_space<smem>>, %arg9: memref<2xf32, #tpu.memory_space<smem>>, %arg10: memref<2x8x128xf32, #tpu.memory_space<vmem>>, %arg11: memref<8x128xf32, #tpu.memory_space<vmem>>, %arg12: memref<8x128xf32, #tpu.memory_space<vmem>>) attributes {dimension_semantics = [#tpu.dimension_semantics<parallel>, #tpu.dimension_semantics<arbitrary>], iteration_bounds = array<i64: 1, 1>, scalar_prefetch = 0 : i64, scratch_operands = 0 : i64, tpu.core_type = #tpu.core_type<tc>, window_params = [{transform_indices = @transform_0, window_bounds = array<i64: 2, 8, 128>}, {transform_indices = @transform_1, window_bounds = array<i64: 1>}, {transform_indices = @transform_2, window_bounds = array<i64: 20>}, {transform_indices = @transform_3, window_bounds = array<i64: 10>}, {transform_indices = @transform_4, window_bounds = array<i64: 100>}, {transform_indices = @transform_5, window_bounds = array<i64: 10>}, {transform_indices = @transform_6, window_bounds = array<i64: 20>}, {transform_indices = @transform_7, window_bounds = array<i64: 2>}, {transform_indices = @transform_8, window_bounds = array<i64: 2, 8, 128>}, {transform_indices = @transform_9, window_bounds = array<i64: 8, 128>}, {transform_indices = @transform_10, window_bounds = array<i64: 8, 128>}]} {
    %c0_i32 = arith.constant 0 : i32
    %0 = arith.cmpi eq, %arg1, %c0_i32 : i32
    %1 = arith.extui %0 : i1 to i32
    %c0_i32_0 = arith.constant 0 : i32
    %2 = arith.cmpi ne, %1, %c0_i32_0 : i32
    scf.if %2 {
      %cst_129 = arith.constant 0.000000e+00 : f32
      %776 = vector.broadcast %cst_129 : f32 to vector<8x128xf32>
      %c0_130 = arith.constant 0 : index
      %c0_131 = arith.constant 0 : index
      %777 = vector.load %arg11[%c0_130, %c0_131] : memref<8x128xf32, #tpu.memory_space<vmem>>, vector<8x128xf32>
      tpu.vector_store %arg11[%c0_130, %c0_131], %776 {strides = array<i32>} : memref<8x128xf32, #tpu.memory_space<vmem>>, vector<8x128xf32>,
      %cst_132 = arith.constant 0.000000e+00 : f32
      %778 = vector.broadcast %cst_132 : f32 to vector<8x128xf32>
      %c0_133 = arith.constant 0 : index
      %c0_134 = arith.constant 0 : index
      %779 = vector.load %arg12[%c0_133, %c0_134] : memref<8x128xf32, #tpu.memory_space<vmem>>, vector<8x128xf32>
      tpu.vector_store %arg12[%c0_133, %c0_134], %778 {strides = array<i32>} : memref<8x128xf32, #tpu.memory_space<vmem>>, vector<8x128xf32>,
    } else {
    }
    %c0 = arith.constant 0 : index
    %3 = memref.load %arg4[%c0] : memref<20xf32, #tpu.memory_space<smem>>
    %c1 = arith.constant 1 : index
    %4 = memref.load %arg4[%c1] : memref<20xf32, #tpu.memory_space<smem>>
    %c2 = arith.constant 2 : index
    %5 = memref.load %arg4[%c2] : memref<20xf32, #tpu.memory_space<smem>>
    %c3 = arith.constant 3 : index
    %6 = memref.load %arg4[%c3] : memref<20xf32, #tpu.memory_space<smem>>
    %c4 = arith.constant 4 : index
    %7 = memref.load %arg4[%c4] : memref<20xf32, #tpu.memory_space<smem>>
    %c5 = arith.constant 5 : index
    %8 = memref.load %arg4[%c5] : memref<20xf32, #tpu.memory_space<smem>>
    %c6 = arith.constant 6 : index
    %9 = memref.load %arg4[%c6] : memref<20xf32, #tpu.memory_space<smem>>
    %c7 = arith.constant 7 : index
    %10 = memref.load %arg4[%c7] : memref<20xf32, #tpu.memory_space<smem>>
    %c8 = arith.constant 8 : index
    %11 = memref.load %arg4[%c8] : memref<20xf32, #tpu.memory_space<smem>>
    %c9 = arith.constant 9 : index
    %12 = memref.load %arg4[%c9] : memref<20xf32, #tpu.memory_space<smem>>
    %c10 = arith.constant 10 : index
    %13 = memref.load %arg4[%c10] : memref<20xf32, #tpu.memory_space<smem>>
    %c11 = arith.constant 11 : index
    %14 = memref.load %arg4[%c11] : memref<20xf32, #tpu.memory_space<smem>>
    %c12 = arith.constant 12 : index
    %15 = memref.load %arg4[%c12] : memref<20xf32, #tpu.memory_space<smem>>
    %c13 = arith.constant 13 : index
    %16 = memref.load %arg4[%c13] : memref<20xf32, #tpu.memory_space<smem>>
    %c14 = arith.constant 14 : index
    %17 = memref.load %arg4[%c14] : memref<20xf32, #tpu.memory_space<smem>>
    %c15 = arith.constant 15 : index
    %18 = memref.load %arg4[%c15] : memref<20xf32, #tpu.memory_space<smem>>
    %c16 = arith.constant 16 : index
    %19 = memref.load %arg4[%c16] : memref<20xf32, #tpu.memory_space<smem>>
    %c17 = arith.constant 17 : index
    %20 = memref.load %arg4[%c17] : memref<20xf32, #tpu.memory_space<smem>>
    %c18 = arith.constant 18 : index
    %21 = memref.load %arg4[%c18] : memref<20xf32, #tpu.memory_space<smem>>
    %c19 = arith.constant 19 : index
    %22 = memref.load %arg4[%c19] : memref<20xf32, #tpu.memory_space<smem>>
    %c0_1 = arith.constant 0 : index
    %23 = memref.load %arg5[%c0_1] : memref<10xf32, #tpu.memory_space<smem>>
    %c1_2 = arith.constant 1 : index
    %24 = memref.load %arg5[%c1_2] : memref<10xf32, #tpu.memory_space<smem>>
    %c2_3 = arith.constant 2 : index
    %25 = memref.load %arg5[%c2_3] : memref<10xf32, #tpu.memory_space<smem>>
    %c3_4 = arith.constant 3 : index
    %26 = memref.load %arg5[%c3_4] : memref<10xf32, #tpu.memory_space<smem>>
    %c4_5 = arith.constant 4 : index
    %27 = memref.load %arg5[%c4_5] : memref<10xf32, #tpu.memory_space<smem>>
    %c5_6 = arith.constant 5 : index
    %28 = memref.load %arg5[%c5_6] : memref<10xf32, #tpu.memory_space<smem>>
    %c6_7 = arith.constant 6 : index
    %29 = memref.load %arg5[%c6_7] : memref<10xf32, #tpu.memory_space<smem>>
    %c7_8 = arith.constant 7 : index
    %30 = memref.load %arg5[%c7_8] : memref<10xf32, #tpu.memory_space<smem>>
    %c8_9 = arith.constant 8 : index
    %31 = memref.load %arg5[%c8_9] : memref<10xf32, #tpu.memory_space<smem>>
    %c9_10 = arith.constant 9 : index
    %32 = memref.load %arg5[%c9_10] : memref<10xf32, #tpu.memory_space<smem>>
    %c0_11 = arith.constant 0 : index
    %33 = memref.load %arg6[%c0_11] : memref<100xf32, #tpu.memory_space<smem>>
    %c1_12 = arith.constant 1 : index
    %34 = memref.load %arg6[%c1_12] : memref<100xf32, #tpu.memory_space<smem>>
    %c2_13 = arith.constant 2 : index
    %35 = memref.load %arg6[%c2_13] : memref<100xf32, #tpu.memory_space<smem>>
    %c3_14 = arith.constant 3 : index
    %36 = memref.load %arg6[%c3_14] : memref<100xf32, #tpu.memory_space<smem>>
    %c4_15 = arith.constant 4 : index
    %37 = memref.load %arg6[%c4_15] : memref<100xf32, #tpu.memory_space<smem>>
    %c5_16 = arith.constant 5 : index
    %38 = memref.load %arg6[%c5_16] : memref<100xf32, #tpu.memory_space<smem>>
    %c6_17 = arith.constant 6 : index
    %39 = memref.load %arg6[%c6_17] : memref<100xf32, #tpu.memory_space<smem>>
    %c7_18 = arith.constant 7 : index
    %40 = memref.load %arg6[%c7_18] : memref<100xf32, #tpu.memory_space<smem>>
    %c8_19 = arith.constant 8 : index
    %41 = memref.load %arg6[%c8_19] : memref<100xf32, #tpu.memory_space<smem>>
    %c9_20 = arith.constant 9 : index
    %42 = memref.load %arg6[%c9_20] : memref<100xf32, #tpu.memory_space<smem>>
    %c10_21 = arith.constant 10 : index
    %43 = memref.load %arg6[%c10_21] : memref<100xf32, #tpu.memory_space<smem>>
    %c11_22 = arith.constant 11 : index
    %44 = memref.load %arg6[%c11_22] : memref<100xf32, #tpu.memory_space<smem>>
    %c12_23 = arith.constant 12 : index
    %45 = memref.load %arg6[%c12_23] : memref<100xf32, #tpu.memory_space<smem>>
    %c13_24 = arith.constant 13 : index
    %46 = memref.load %arg6[%c13_24] : memref<100xf32, #tpu.memory_space<smem>>
    %c14_25 = arith.constant 14 : index
    %47 = memref.load %arg6[%c14_25] : memref<100xf32, #tpu.memory_space<smem>>
    %c15_26 = arith.constant 15 : index
    %48 = memref.load %arg6[%c15_26] : memref<100xf32, #tpu.memory_space<smem>>
    %c16_27 = arith.constant 16 : index
    %49 = memref.load %arg6[%c16_27] : memref<100xf32, #tpu.memory_space<smem>>
    %c17_28 = arith.constant 17 : index
    %50 = memref.load %arg6[%c17_28] : memref<100xf32, #tpu.memory_space<smem>>
    %c18_29 = arith.constant 18 : index
    %51 = memref.load %arg6[%c18_29] : memref<100xf32, #tpu.memory_space<smem>>
    %c19_30 = arith.constant 19 : index
    %52 = memref.load %arg6[%c19_30] : memref<100xf32, #tpu.memory_space<smem>>
    %c20 = arith.constant 20 : index
    %53 = memref.load %arg6[%c20] : memref<100xf32, #tpu.memory_space<smem>>
    %c21 = arith.constant 21 : index
    %54 = memref.load %arg6[%c21] : memref<100xf32, #tpu.memory_space<smem>>
    %c22 = arith.constant 22 : index
    %55 = memref.load %arg6[%c22] : memref<100xf32, #tpu.memory_space<smem>>
    %c23 = arith.constant 23 : index
    %56 = memref.load %arg6[%c23] : memref<100xf32, #tpu.memory_space<smem>>
    %c24 = arith.constant 24 : index
    %57 = memref.load %arg6[%c24] : memref<100xf32, #tpu.memory_space<smem>>
    %c25 = arith.constant 25 : index
    %58 = memref.load %arg6[%c25] : memref<100xf32, #tpu.memory_space<smem>>
    %c26 = arith.constant 26 : index
    %59 = memref.load %arg6[%c26] : memref<100xf32, #tpu.memory_space<smem>>
    %c27 = arith.constant 27 : index
    %60 = memref.load %arg6[%c27] : memref<100xf32, #tpu.memory_space<smem>>
    %c28 = arith.constant 28 : index
    %61 = memref.load %arg6[%c28] : memref<100xf32, #tpu.memory_space<smem>>
    %c29 = arith.constant 29 : index
    %62 = memref.load %arg6[%c29] : memref<100xf32, #tpu.memory_space<smem>>
    %c30 = arith.constant 30 : index
    %63 = memref.load %arg6[%c30] : memref<100xf32, #tpu.memory_space<smem>>
    %c31 = arith.constant 31 : index
    %64 = memref.load %arg6[%c31] : memref<100xf32, #tpu.memory_space<smem>>
    %c32 = arith.constant 32 : index
    %65 = memref.load %arg6[%c32] : memref<100xf32, #tpu.memory_space<smem>>
    %c33 = arith.constant 33 : index
    %66 = memref.load %arg6[%c33] : memref<100xf32, #tpu.memory_space<smem>>
    %c34 = arith.constant 34 : index
    %67 = memref.load %arg6[%c34] : memref<100xf32, #tpu.memory_space<smem>>
    %c35 = arith.constant 35 : index
    %68 = memref.load %arg6[%c35] : memref<100xf32, #tpu.memory_space<smem>>
    %c36 = arith.constant 36 : index
    %69 = memref.load %arg6[%c36] : memref<100xf32, #tpu.memory_space<smem>>
    %c37 = arith.constant 37 : index
    %70 = memref.load %arg6[%c37] : memref<100xf32, #tpu.memory_space<smem>>
    %c38 = arith.constant 38 : index
    %71 = memref.load %arg6[%c38] : memref<100xf32, #tpu.memory_space<smem>>
    %c39 = arith.constant 39 : index
    %72 = memref.load %arg6[%c39] : memref<100xf32, #tpu.memory_space<smem>>
    %c40 = arith.constant 40 : index
    %73 = memref.load %arg6[%c40] : memref<100xf32, #tpu.memory_space<smem>>
    %c41 = arith.constant 41 : index
    %74 = memref.load %arg6[%c41] : memref<100xf32, #tpu.memory_space<smem>>
    %c42 = arith.constant 42 : index
    %75 = memref.load %arg6[%c42] : memref<100xf32, #tpu.memory_space<smem>>
    %c43 = arith.constant 43 : index
    %76 = memref.load %arg6[%c43] : memref<100xf32, #tpu.memory_space<smem>>
    %c44 = arith.constant 44 : index
    %77 = memref.load %arg6[%c44] : memref<100xf32, #tpu.memory_space<smem>>
    %c45 = arith.constant 45 : index
    %78 = memref.load %arg6[%c45] : memref<100xf32, #tpu.memory_space<smem>>
    %c46 = arith.constant 46 : index
    %79 = memref.load %arg6[%c46] : memref<100xf32, #tpu.memory_space<smem>>
    %c47 = arith.constant 47 : index
    %80 = memref.load %arg6[%c47] : memref<100xf32, #tpu.memory_space<smem>>
    %c48 = arith.constant 48 : index
    %81 = memref.load %arg6[%c48] : memref<100xf32, #tpu.memory_space<smem>>
    %c49 = arith.constant 49 : index
    %82 = memref.load %arg6[%c49] : memref<100xf32, #tpu.memory_space<smem>>
    %c50 = arith.constant 50 : index
    %83 = memref.load %arg6[%c50] : memref<100xf32, #tpu.memory_space<smem>>
    %c51 = arith.constant 51 : index
    %84 = memref.load %arg6[%c51] : memref<100xf32, #tpu.memory_space<smem>>
    %c52 = arith.constant 52 : index
    %85 = memref.load %arg6[%c52] : memref<100xf32, #tpu.memory_space<smem>>
    %c53 = arith.constant 53 : index
    %86 = memref.load %arg6[%c53] : memref<100xf32, #tpu.memory_space<smem>>
    %c54 = arith.constant 54 : index
    %87 = memref.load %arg6[%c54] : memref<100xf32, #tpu.memory_space<smem>>
    %c55 = arith.constant 55 : index
    %88 = memref.load %arg6[%c55] : memref<100xf32, #tpu.memory_space<smem>>
    %c56 = arith.constant 56 : index
    %89 = memref.load %arg6[%c56] : memref<100xf32, #tpu.memory_space<smem>>
    %c57 = arith.constant 57 : index
    %90 = memref.load %arg6[%c57] : memref<100xf32, #tpu.memory_space<smem>>
    %c58 = arith.constant 58 : index
    %91 = memref.load %arg6[%c58] : memref<100xf32, #tpu.memory_space<smem>>
    %c59 = arith.constant 59 : index
    %92 = memref.load %arg6[%c59] : memref<100xf32, #tpu.memory_space<smem>>
    %c60 = arith.constant 60 : index
    %93 = memref.load %arg6[%c60] : memref<100xf32, #tpu.memory_space<smem>>
    %c61 = arith.constant 61 : index
    %94 = memref.load %arg6[%c61] : memref<100xf32, #tpu.memory_space<smem>>
    %c62 = arith.constant 62 : index
    %95 = memref.load %arg6[%c62] : memref<100xf32, #tpu.memory_space<smem>>
    %c63 = arith.constant 63 : index
    %96 = memref.load %arg6[%c63] : memref<100xf32, #tpu.memory_space<smem>>
    %c64 = arith.constant 64 : index
    %97 = memref.load %arg6[%c64] : memref<100xf32, #tpu.memory_space<smem>>
    %c65 = arith.constant 65 : index
    %98 = memref.load %arg6[%c65] : memref<100xf32, #tpu.memory_space<smem>>
    %c66 = arith.constant 66 : index
    %99 = memref.load %arg6[%c66] : memref<100xf32, #tpu.memory_space<smem>>
    %c67 = arith.constant 67 : index
    %100 = memref.load %arg6[%c67] : memref<100xf32, #tpu.memory_space<smem>>
    %c68 = arith.constant 68 : index
    %101 = memref.load %arg6[%c68] : memref<100xf32, #tpu.memory_space<smem>>
    %c69 = arith.constant 69 : index
    %102 = memref.load %arg6[%c69] : memref<100xf32, #tpu.memory_space<smem>>
    %c70 = arith.constant 70 : index
    %103 = memref.load %arg6[%c70] : memref<100xf32, #tpu.memory_space<smem>>
    %c71 = arith.constant 71 : index
    %104 = memref.load %arg6[%c71] : memref<100xf32, #tpu.memory_space<smem>>
    %c72 = arith.constant 72 : index
    %105 = memref.load %arg6[%c72] : memref<100xf32, #tpu.memory_space<smem>>
    %c73 = arith.constant 73 : index
    %106 = memref.load %arg6[%c73] : memref<100xf32, #tpu.memory_space<smem>>
    %c74 = arith.constant 74 : index
    %107 = memref.load %arg6[%c74] : memref<100xf32, #tpu.memory_space<smem>>
    %c75 = arith.constant 75 : index
    %108 = memref.load %arg6[%c75] : memref<100xf32, #tpu.memory_space<smem>>
    %c76 = arith.constant 76 : index
    %109 = memref.load %arg6[%c76] : memref<100xf32, #tpu.memory_space<smem>>
    %c77 = arith.constant 77 : index
    %110 = memref.load %arg6[%c77] : memref<100xf32, #tpu.memory_space<smem>>
    %c78 = arith.constant 78 : index
    %111 = memref.load %arg6[%c78] : memref<100xf32, #tpu.memory_space<smem>>
    %c79 = arith.constant 79 : index
    %112 = memref.load %arg6[%c79] : memref<100xf32, #tpu.memory_space<smem>>
    %c80 = arith.constant 80 : index
    %113 = memref.load %arg6[%c80] : memref<100xf32, #tpu.memory_space<smem>>
    %c81 = arith.constant 81 : index
    %114 = memref.load %arg6[%c81] : memref<100xf32, #tpu.memory_space<smem>>
    %c82 = arith.constant 82 : index
    %115 = memref.load %arg6[%c82] : memref<100xf32, #tpu.memory_space<smem>>
    %c83 = arith.constant 83 : index
    %116 = memref.load %arg6[%c83] : memref<100xf32, #tpu.memory_space<smem>>
    %c84 = arith.constant 84 : index
    %117 = memref.load %arg6[%c84] : memref<100xf32, #tpu.memory_space<smem>>
    %c85 = arith.constant 85 : index
    %118 = memref.load %arg6[%c85] : memref<100xf32, #tpu.memory_space<smem>>
    %c86 = arith.constant 86 : index
    %119 = memref.load %arg6[%c86] : memref<100xf32, #tpu.memory_space<smem>>
    %c87 = arith.constant 87 : index
    %120 = memref.load %arg6[%c87] : memref<100xf32, #tpu.memory_space<smem>>
    %c88 = arith.constant 88 : index
    %121 = memref.load %arg6[%c88] : memref<100xf32, #tpu.memory_space<smem>>
    %c89 = arith.constant 89 : index
    %122 = memref.load %arg6[%c89] : memref<100xf32, #tpu.memory_space<smem>>
    %c90 = arith.constant 90 : index
    %123 = memref.load %arg6[%c90] : memref<100xf32, #tpu.memory_space<smem>>
    %c91 = arith.constant 91 : index
    %124 = memref.load %arg6[%c91] : memref<100xf32, #tpu.memory_space<smem>>
    %c92 = arith.constant 92 : index
    %125 = memref.load %arg6[%c92] : memref<100xf32, #tpu.memory_space<smem>>
    %c93 = arith.constant 93 : index
    %126 = memref.load %arg6[%c93] : memref<100xf32, #tpu.memory_space<smem>>
    %c94 = arith.constant 94 : index
    %127 = memref.load %arg6[%c94] : memref<100xf32, #tpu.memory_space<smem>>
    %c95 = arith.constant 95 : index
    %128 = memref.load %arg6[%c95] : memref<100xf32, #tpu.memory_space<smem>>
    %c96 = arith.constant 96 : index
    %129 = memref.load %arg6[%c96] : memref<100xf32, #tpu.memory_space<smem>>
    %c97 = arith.constant 97 : index
    %130 = memref.load %arg6[%c97] : memref<100xf32, #tpu.memory_space<smem>>
    %c98 = arith.constant 98 : index
    %131 = memref.load %arg6[%c98] : memref<100xf32, #tpu.memory_space<smem>>
    %c99 = arith.constant 99 : index
    %132 = memref.load %arg6[%c99] : memref<100xf32, #tpu.memory_space<smem>>
    %c0_31 = arith.constant 0 : index
    %133 = memref.load %arg7[%c0_31] : memref<10xf32, #tpu.memory_space<smem>>
    %c1_32 = arith.constant 1 : index
    %134 = memref.load %arg7[%c1_32] : memref<10xf32, #tpu.memory_space<smem>>
    %c2_33 = arith.constant 2 : index
    %135 = memref.load %arg7[%c2_33] : memref<10xf32, #tpu.memory_space<smem>>
    %c3_34 = arith.constant 3 : index
    %136 = memref.load %arg7[%c3_34] : memref<10xf32, #tpu.memory_space<smem>>
    %c4_35 = arith.constant 4 : index
    %137 = memref.load %arg7[%c4_35] : memref<10xf32, #tpu.memory_space<smem>>
    %c5_36 = arith.constant 5 : index
    %138 = memref.load %arg7[%c5_36] : memref<10xf32, #tpu.memory_space<smem>>
    %c6_37 = arith.constant 6 : index
    %139 = memref.load %arg7[%c6_37] : memref<10xf32, #tpu.memory_space<smem>>
    %c7_38 = arith.constant 7 : index
    %140 = memref.load %arg7[%c7_38] : memref<10xf32, #tpu.memory_space<smem>>
    %c8_39 = arith.constant 8 : index
    %141 = memref.load %arg7[%c8_39] : memref<10xf32, #tpu.memory_space<smem>>
    %c9_40 = arith.constant 9 : index
    %142 = memref.load %arg7[%c9_40] : memref<10xf32, #tpu.memory_space<smem>>
    %c0_41 = arith.constant 0 : index
    %143 = memref.load %arg8[%c0_41] : memref<20xf32, #tpu.memory_space<smem>>
    %c1_42 = arith.constant 1 : index
    %144 = memref.load %arg8[%c1_42] : memref<20xf32, #tpu.memory_space<smem>>
    %c2_43 = arith.constant 2 : index
    %145 = memref.load %arg8[%c2_43] : memref<20xf32, #tpu.memory_space<smem>>
    %c3_44 = arith.constant 3 : index
    %146 = memref.load %arg8[%c3_44] : memref<20xf32, #tpu.memory_space<smem>>
    %c4_45 = arith.constant 4 : index
    %147 = memref.load %arg8[%c4_45] : memref<20xf32, #tpu.memory_space<smem>>
    %c5_46 = arith.constant 5 : index
    %148 = memref.load %arg8[%c5_46] : memref<20xf32, #tpu.memory_space<smem>>
    %c6_47 = arith.constant 6 : index
    %149 = memref.load %arg8[%c6_47] : memref<20xf32, #tpu.memory_space<smem>>
    %c7_48 = arith.constant 7 : index
    %150 = memref.load %arg8[%c7_48] : memref<20xf32, #tpu.memory_space<smem>>
    %c8_49 = arith.constant 8 : index
    %151 = memref.load %arg8[%c8_49] : memref<20xf32, #tpu.memory_space<smem>>
    %c9_50 = arith.constant 9 : index
    %152 = memref.load %arg8[%c9_50] : memref<20xf32, #tpu.memory_space<smem>>
    %c10_51 = arith.constant 10 : index
    %153 = memref.load %arg8[%c10_51] : memref<20xf32, #tpu.memory_space<smem>>
    %c11_52 = arith.constant 11 : index
    %154 = memref.load %arg8[%c11_52] : memref<20xf32, #tpu.memory_space<smem>>
    %c12_53 = arith.constant 12 : index
    %155 = memref.load %arg8[%c12_53] : memref<20xf32, #tpu.memory_space<smem>>
    %c13_54 = arith.constant 13 : index
    %156 = memref.load %arg8[%c13_54] : memref<20xf32, #tpu.memory_space<smem>>
    %c14_55 = arith.constant 14 : index
    %157 = memref.load %arg8[%c14_55] : memref<20xf32, #tpu.memory_space<smem>>
    %c15_56 = arith.constant 15 : index
    %158 = memref.load %arg8[%c15_56] : memref<20xf32, #tpu.memory_space<smem>>
    %c16_57 = arith.constant 16 : index
    %159 = memref.load %arg8[%c16_57] : memref<20xf32, #tpu.memory_space<smem>>
    %c17_58 = arith.constant 17 : index
    %160 = memref.load %arg8[%c17_58] : memref<20xf32, #tpu.memory_space<smem>>
    %c18_59 = arith.constant 18 : index
    %161 = memref.load %arg8[%c18_59] : memref<20xf32, #tpu.memory_space<smem>>
    %c19_60 = arith.constant 19 : index
    %162 = memref.load %arg8[%c19_60] : memref<20xf32, #tpu.memory_space<smem>>
    %c0_61 = arith.constant 0 : index
    %163 = memref.load %arg9[%c0_61] : memref<2xf32, #tpu.memory_space<smem>>
    %c1_62 = arith.constant 1 : index
    %164 = memref.load %arg9[%c1_62] : memref<2xf32, #tpu.memory_space<smem>>
    %c0_63 = arith.constant 0 : index
    %c0_64 = arith.constant 0 : index
    %c0_65 = arith.constant 0 : index
    %165 = vector.load %arg2[%c0_63, %c0_64, %c0_65] : memref<2x8x128xf32, #tpu.memory_space<vmem>>, vector<1x8x128xf32>
    %166 = vector.shape_cast %165 : vector<1x8x128xf32> to vector<8x128xf32>
    %c1_66 = arith.constant 1 : index
    %c0_67 = arith.constant 0 : index
    %c0_68 = arith.constant 0 : index
    %167 = vector.load %arg2[%c1_66, %c0_67, %c0_68] : memref<2x8x128xf32, #tpu.memory_space<vmem>>, vector<1x8x128xf32>
    %168 = vector.shape_cast %167 : vector<1x8x128xf32> to vector<8x128xf32>
    %169 = vector.broadcast %3 : f32 to vector<8x128xf32>
    %170 = arith.mulf %166, %169 : vector<8x128xf32>
    %171 = vector.broadcast %13 : f32 to vector<8x128xf32>
    %172 = arith.mulf %168, %171 : vector<8x128xf32>
    %173 = arith.addf %170, %172 : vector<8x128xf32>
    %174 = vector.broadcast %23 : f32 to vector<8x128xf32>
    %175 = arith.addf %173, %174 : vector<8x128xf32>
    %cst = arith.constant 0.000000e+00 : f32
    %176 = vector.broadcast %cst : f32 to vector<8x128xf32>
    %177 = arith.cmpf ogt, %175, %176 : vector<8x128xf32>
    %178 = math.exp %175 : vector<8x128xf32>
    %cst_69 = arith.constant 1.000000e+00 : f32
    %179 = vector.broadcast %cst_69 : f32 to vector<8x128xf32>
    %180 = arith.subf %178, %179 : vector<8x128xf32>
    %181 = arith.select %177, %175, %180 : vector<8x128xi1>, vector<8x128xf32>
    %182 = vector.broadcast %4 : f32 to vector<8x128xf32>
    %183 = arith.mulf %166, %182 : vector<8x128xf32>
    %184 = vector.broadcast %14 : f32 to vector<8x128xf32>
    %185 = arith.mulf %168, %184 : vector<8x128xf32>
    %186 = arith.addf %183, %185 : vector<8x128xf32>
    %187 = vector.broadcast %24 : f32 to vector<8x128xf32>
    %188 = arith.addf %186, %187 : vector<8x128xf32>
    %cst_70 = arith.constant 0.000000e+00 : f32
    %189 = vector.broadcast %cst_70 : f32 to vector<8x128xf32>
    %190 = arith.cmpf ogt, %188, %189 : vector<8x128xf32>
    %191 = math.exp %188 : vector<8x128xf32>
    %cst_71 = arith.constant 1.000000e+00 : f32
    %192 = vector.broadcast %cst_71 : f32 to vector<8x128xf32>
    %193 = arith.subf %191, %192 : vector<8x128xf32>
    %194 = arith.select %190, %188, %193 : vector<8x128xi1>, vector<8x128xf32>
    %195 = vector.broadcast %5 : f32 to vector<8x128xf32>
    %196 = arith.mulf %166, %195 : vector<8x128xf32>
    %197 = vector.broadcast %15 : f32 to vector<8x128xf32>
    %198 = arith.mulf %168, %197 : vector<8x128xf32>
    %199 = arith.addf %196, %198 : vector<8x128xf32>
    %200 = vector.broadcast %25 : f32 to vector<8x128xf32>
    %201 = arith.addf %199, %200 : vector<8x128xf32>
    %cst_72 = arith.constant 0.000000e+00 : f32
    %202 = vector.broadcast %cst_72 : f32 to vector<8x128xf32>
    %203 = arith.cmpf ogt, %201, %202 : vector<8x128xf32>
    %204 = math.exp %201 : vector<8x128xf32>
    %cst_73 = arith.constant 1.000000e+00 : f32
    %205 = vector.broadcast %cst_73 : f32 to vector<8x128xf32>
    %206 = arith.subf %204, %205 : vector<8x128xf32>
    %207 = arith.select %203, %201, %206 : vector<8x128xi1>, vector<8x128xf32>
    %208 = vector.broadcast %6 : f32 to vector<8x128xf32>
    %209 = arith.mulf %166, %208 : vector<8x128xf32>
    %210 = vector.broadcast %16 : f32 to vector<8x128xf32>
    %211 = arith.mulf %168, %210 : vector<8x128xf32>
    %212 = arith.addf %209, %211 : vector<8x128xf32>
    %213 = vector.broadcast %26 : f32 to vector<8x128xf32>
    %214 = arith.addf %212, %213 : vector<8x128xf32>
    %cst_74 = arith.constant 0.000000e+00 : f32
    %215 = vector.broadcast %cst_74 : f32 to vector<8x128xf32>
    %216 = arith.cmpf ogt, %214, %215 : vector<8x128xf32>
    %217 = math.exp %214 : vector<8x128xf32>
    %cst_75 = arith.constant 1.000000e+00 : f32
    %218 = vector.broadcast %cst_75 : f32 to vector<8x128xf32>
    %219 = arith.subf %217, %218 : vector<8x128xf32>
    %220 = arith.select %216, %214, %219 : vector<8x128xi1>, vector<8x128xf32>
    %221 = vector.broadcast %7 : f32 to vector<8x128xf32>
    %222 = arith.mulf %166, %221 : vector<8x128xf32>
    %223 = vector.broadcast %17 : f32 to vector<8x128xf32>
    %224 = arith.mulf %168, %223 : vector<8x128xf32>
    %225 = arith.addf %222, %224 : vector<8x128xf32>
    %226 = vector.broadcast %27 : f32 to vector<8x128xf32>
    %227 = arith.addf %225, %226 : vector<8x128xf32>
    %cst_76 = arith.constant 0.000000e+00 : f32
    %228 = vector.broadcast %cst_76 : f32 to vector<8x128xf32>
    %229 = arith.cmpf ogt, %227, %228 : vector<8x128xf32>
    %230 = math.exp %227 : vector<8x128xf32>
    %cst_77 = arith.constant 1.000000e+00 : f32
    %231 = vector.broadcast %cst_77 : f32 to vector<8x128xf32>
    %232 = arith.subf %230, %231 : vector<8x128xf32>
    %233 = arith.select %229, %227, %232 : vector<8x128xi1>, vector<8x128xf32>
    %234 = vector.broadcast %8 : f32 to vector<8x128xf32>
    %235 = arith.mulf %166, %234 : vector<8x128xf32>
    %236 = vector.broadcast %18 : f32 to vector<8x128xf32>
    %237 = arith.mulf %168, %236 : vector<8x128xf32>
    %238 = arith.addf %235, %237 : vector<8x128xf32>
    %239 = vector.broadcast %28 : f32 to vector<8x128xf32>
    %240 = arith.addf %238, %239 : vector<8x128xf32>
    %cst_78 = arith.constant 0.000000e+00 : f32
    %241 = vector.broadcast %cst_78 : f32 to vector<8x128xf32>
    %242 = arith.cmpf ogt, %240, %241 : vector<8x128xf32>
    %243 = math.exp %240 : vector<8x128xf32>
    %cst_79 = arith.constant 1.000000e+00 : f32
    %244 = vector.broadcast %cst_79 : f32 to vector<8x128xf32>
    %245 = arith.subf %243, %244 : vector<8x128xf32>
    %246 = arith.select %242, %240, %245 : vector<8x128xi1>, vector<8x128xf32>
    %247 = vector.broadcast %9 : f32 to vector<8x128xf32>
    %248 = arith.mulf %166, %247 : vector<8x128xf32>
    %249 = vector.broadcast %19 : f32 to vector<8x128xf32>
    %250 = arith.mulf %168, %249 : vector<8x128xf32>
    %251 = arith.addf %248, %250 : vector<8x128xf32>
    %252 = vector.broadcast %29 : f32 to vector<8x128xf32>
    %253 = arith.addf %251, %252 : vector<8x128xf32>
    %cst_80 = arith.constant 0.000000e+00 : f32
    %254 = vector.broadcast %cst_80 : f32 to vector<8x128xf32>
    %255 = arith.cmpf ogt, %253, %254 : vector<8x128xf32>
    %256 = math.exp %253 : vector<8x128xf32>
    %cst_81 = arith.constant 1.000000e+00 : f32
    %257 = vector.broadcast %cst_81 : f32 to vector<8x128xf32>
    %258 = arith.subf %256, %257 : vector<8x128xf32>
    %259 = arith.select %255, %253, %258 : vector<8x128xi1>, vector<8x128xf32>
    %260 = vector.broadcast %10 : f32 to vector<8x128xf32>
    %261 = arith.mulf %166, %260 : vector<8x128xf32>
    %262 = vector.broadcast %20 : f32 to vector<8x128xf32>
    %263 = arith.mulf %168, %262 : vector<8x128xf32>
    %264 = arith.addf %261, %263 : vector<8x128xf32>
    %265 = vector.broadcast %30 : f32 to vector<8x128xf32>
    %266 = arith.addf %264, %265 : vector<8x128xf32>
    %cst_82 = arith.constant 0.000000e+00 : f32
    %267 = vector.broadcast %cst_82 : f32 to vector<8x128xf32>
    %268 = arith.cmpf ogt, %266, %267 : vector<8x128xf32>
    %269 = math.exp %266 : vector<8x128xf32>
    %cst_83 = arith.constant 1.000000e+00 : f32
    %270 = vector.broadcast %cst_83 : f32 to vector<8x128xf32>
    %271 = arith.subf %269, %270 : vector<8x128xf32>
    %272 = arith.select %268, %266, %271 : vector<8x128xi1>, vector<8x128xf32>
    %273 = vector.broadcast %11 : f32 to vector<8x128xf32>
    %274 = arith.mulf %166, %273 : vector<8x128xf32>
    %275 = vector.broadcast %21 : f32 to vector<8x128xf32>
    %276 = arith.mulf %168, %275 : vector<8x128xf32>
    %277 = arith.addf %274, %276 : vector<8x128xf32>
    %278 = vector.broadcast %31 : f32 to vector<8x128xf32>
    %279 = arith.addf %277, %278 : vector<8x128xf32>
    %cst_84 = arith.constant 0.000000e+00 : f32
    %280 = vector.broadcast %cst_84 : f32 to vector<8x128xf32>
    %281 = arith.cmpf ogt, %279, %280 : vector<8x128xf32>
    %282 = math.exp %279 : vector<8x128xf32>
    %cst_85 = arith.constant 1.000000e+00 : f32
    %283 = vector.broadcast %cst_85 : f32 to vector<8x128xf32>
    %284 = arith.subf %282, %283 : vector<8x128xf32>
    %285 = arith.select %281, %279, %284 : vector<8x128xi1>, vector<8x128xf32>
    %286 = vector.broadcast %12 : f32 to vector<8x128xf32>
    %287 = arith.mulf %166, %286 : vector<8x128xf32>
    %288 = vector.broadcast %22 : f32 to vector<8x128xf32>
    %289 = arith.mulf %168, %288 : vector<8x128xf32>
    %290 = arith.addf %287, %289 : vector<8x128xf32>
    %291 = vector.broadcast %32 : f32 to vector<8x128xf32>
    %292 = arith.addf %290, %291 : vector<8x128xf32>
    %cst_86 = arith.constant 0.000000e+00 : f32
    %293 = vector.broadcast %cst_86 : f32 to vector<8x128xf32>
    %294 = arith.cmpf ogt, %292, %293 : vector<8x128xf32>
    %295 = math.exp %292 : vector<8x128xf32>
    %cst_87 = arith.constant 1.000000e+00 : f32
    %296 = vector.broadcast %cst_87 : f32 to vector<8x128xf32>
    %297 = arith.subf %295, %296 : vector<8x128xf32>
    %298 = arith.select %294, %292, %297 : vector<8x128xi1>, vector<8x128xf32>
    %299 = vector.broadcast %33 : f32 to vector<8x128xf32>
    %300 = arith.mulf %181, %299 : vector<8x128xf32>
    %301 = vector.broadcast %43 : f32 to vector<8x128xf32>
    %302 = arith.mulf %194, %301 : vector<8x128xf32>
    %303 = arith.addf %300, %302 : vector<8x128xf32>
    %304 = vector.broadcast %53 : f32 to vector<8x128xf32>
    %305 = arith.mulf %207, %304 : vector<8x128xf32>
    %306 = arith.addf %303, %305 : vector<8x128xf32>
    %307 = vector.broadcast %63 : f32 to vector<8x128xf32>
    %308 = arith.mulf %220, %307 : vector<8x128xf32>
    %309 = arith.addf %306, %308 : vector<8x128xf32>
    %310 = vector.broadcast %73 : f32 to vector<8x128xf32>
    %311 = arith.mulf %233, %310 : vector<8x128xf32>
    %312 = arith.addf %309, %311 : vector<8x128xf32>
    %313 = vector.broadcast %83 : f32 to vector<8x128xf32>
    %314 = arith.mulf %246, %313 : vector<8x128xf32>
    %315 = arith.addf %312, %314 : vector<8x128xf32>
    %316 = vector.broadcast %93 : f32 to vector<8x128xf32>
    %317 = arith.mulf %259, %316 : vector<8x128xf32>
    %318 = arith.addf %315, %317 : vector<8x128xf32>
    %319 = vector.broadcast %103 : f32 to vector<8x128xf32>
    %320 = arith.mulf %272, %319 : vector<8x128xf32>
    %321 = arith.addf %318, %320 : vector<8x128xf32>
    %322 = vector.broadcast %113 : f32 to vector<8x128xf32>
    %323 = arith.mulf %285, %322 : vector<8x128xf32>
    %324 = arith.addf %321, %323 : vector<8x128xf32>
    %325 = vector.broadcast %123 : f32 to vector<8x128xf32>
    %326 = arith.mulf %298, %325 : vector<8x128xf32>
    %327 = arith.addf %324, %326 : vector<8x128xf32>
    %328 = vector.broadcast %133 : f32 to vector<8x128xf32>
    %329 = arith.addf %327, %328 : vector<8x128xf32>
    %cst_88 = arith.constant 0.000000e+00 : f32
    %330 = vector.broadcast %cst_88 : f32 to vector<8x128xf32>
    %331 = arith.cmpf ogt, %329, %330 : vector<8x128xf32>
    %332 = math.exp %329 : vector<8x128xf32>
    %cst_89 = arith.constant 1.000000e+00 : f32
    %333 = vector.broadcast %cst_89 : f32 to vector<8x128xf32>
    %334 = arith.subf %332, %333 : vector<8x128xf32>
    %335 = arith.select %331, %329, %334 : vector<8x128xi1>, vector<8x128xf32>
    %336 = vector.broadcast %34 : f32 to vector<8x128xf32>
    %337 = arith.mulf %181, %336 : vector<8x128xf32>
    %338 = vector.broadcast %44 : f32 to vector<8x128xf32>
    %339 = arith.mulf %194, %338 : vector<8x128xf32>
    %340 = arith.addf %337, %339 : vector<8x128xf32>
    %341 = vector.broadcast %54 : f32 to vector<8x128xf32>
    %342 = arith.mulf %207, %341 : vector<8x128xf32>
    %343 = arith.addf %340, %342 : vector<8x128xf32>
    %344 = vector.broadcast %64 : f32 to vector<8x128xf32>
    %345 = arith.mulf %220, %344 : vector<8x128xf32>
    %346 = arith.addf %343, %345 : vector<8x128xf32>
    %347 = vector.broadcast %74 : f32 to vector<8x128xf32>
    %348 = arith.mulf %233, %347 : vector<8x128xf32>
    %349 = arith.addf %346, %348 : vector<8x128xf32>
    %350 = vector.broadcast %84 : f32 to vector<8x128xf32>
    %351 = arith.mulf %246, %350 : vector<8x128xf32>
    %352 = arith.addf %349, %351 : vector<8x128xf32>
    %353 = vector.broadcast %94 : f32 to vector<8x128xf32>
    %354 = arith.mulf %259, %353 : vector<8x128xf32>
    %355 = arith.addf %352, %354 : vector<8x128xf32>
    %356 = vector.broadcast %104 : f32 to vector<8x128xf32>
    %357 = arith.mulf %272, %356 : vector<8x128xf32>
    %358 = arith.addf %355, %357 : vector<8x128xf32>
    %359 = vector.broadcast %114 : f32 to vector<8x128xf32>
    %360 = arith.mulf %285, %359 : vector<8x128xf32>
    %361 = arith.addf %358, %360 : vector<8x128xf32>
    %362 = vector.broadcast %124 : f32 to vector<8x128xf32>
    %363 = arith.mulf %298, %362 : vector<8x128xf32>
    %364 = arith.addf %361, %363 : vector<8x128xf32>
    %365 = vector.broadcast %134 : f32 to vector<8x128xf32>
    %366 = arith.addf %364, %365 : vector<8x128xf32>
    %cst_90 = arith.constant 0.000000e+00 : f32
    %367 = vector.broadcast %cst_90 : f32 to vector<8x128xf32>
    %368 = arith.cmpf ogt, %366, %367 : vector<8x128xf32>
    %369 = math.exp %366 : vector<8x128xf32>
    %cst_91 = arith.constant 1.000000e+00 : f32
    %370 = vector.broadcast %cst_91 : f32 to vector<8x128xf32>
    %371 = arith.subf %369, %370 : vector<8x128xf32>
    %372 = arith.select %368, %366, %371 : vector<8x128xi1>, vector<8x128xf32>
    %373 = vector.broadcast %35 : f32 to vector<8x128xf32>
    %374 = arith.mulf %181, %373 : vector<8x128xf32>
    %375 = vector.broadcast %45 : f32 to vector<8x128xf32>
    %376 = arith.mulf %194, %375 : vector<8x128xf32>
    %377 = arith.addf %374, %376 : vector<8x128xf32>
    %378 = vector.broadcast %55 : f32 to vector<8x128xf32>
    %379 = arith.mulf %207, %378 : vector<8x128xf32>
    %380 = arith.addf %377, %379 : vector<8x128xf32>
    %381 = vector.broadcast %65 : f32 to vector<8x128xf32>
    %382 = arith.mulf %220, %381 : vector<8x128xf32>
    %383 = arith.addf %380, %382 : vector<8x128xf32>
    %384 = vector.broadcast %75 : f32 to vector<8x128xf32>
    %385 = arith.mulf %233, %384 : vector<8x128xf32>
    %386 = arith.addf %383, %385 : vector<8x128xf32>
    %387 = vector.broadcast %85 : f32 to vector<8x128xf32>
    %388 = arith.mulf %246, %387 : vector<8x128xf32>
    %389 = arith.addf %386, %388 : vector<8x128xf32>
    %390 = vector.broadcast %95 : f32 to vector<8x128xf32>
    %391 = arith.mulf %259, %390 : vector<8x128xf32>
    %392 = arith.addf %389, %391 : vector<8x128xf32>
    %393 = vector.broadcast %105 : f32 to vector<8x128xf32>
    %394 = arith.mulf %272, %393 : vector<8x128xf32>
    %395 = arith.addf %392, %394 : vector<8x128xf32>
    %396 = vector.broadcast %115 : f32 to vector<8x128xf32>
    %397 = arith.mulf %285, %396 : vector<8x128xf32>
    %398 = arith.addf %395, %397 : vector<8x128xf32>
    %399 = vector.broadcast %125 : f32 to vector<8x128xf32>
    %400 = arith.mulf %298, %399 : vector<8x128xf32>
    %401 = arith.addf %398, %400 : vector<8x128xf32>
    %402 = vector.broadcast %135 : f32 to vector<8x128xf32>
    %403 = arith.addf %401, %402 : vector<8x128xf32>
    %cst_92 = arith.constant 0.000000e+00 : f32
    %404 = vector.broadcast %cst_92 : f32 to vector<8x128xf32>
    %405 = arith.cmpf ogt, %403, %404 : vector<8x128xf32>
    %406 = math.exp %403 : vector<8x128xf32>
    %cst_93 = arith.constant 1.000000e+00 : f32
    %407 = vector.broadcast %cst_93 : f32 to vector<8x128xf32>
    %408 = arith.subf %406, %407 : vector<8x128xf32>
    %409 = arith.select %405, %403, %408 : vector<8x128xi1>, vector<8x128xf32>
    %410 = vector.broadcast %36 : f32 to vector<8x128xf32>
    %411 = arith.mulf %181, %410 : vector<8x128xf32>
    %412 = vector.broadcast %46 : f32 to vector<8x128xf32>
    %413 = arith.mulf %194, %412 : vector<8x128xf32>
    %414 = arith.addf %411, %413 : vector<8x128xf32>
    %415 = vector.broadcast %56 : f32 to vector<8x128xf32>
    %416 = arith.mulf %207, %415 : vector<8x128xf32>
    %417 = arith.addf %414, %416 : vector<8x128xf32>
    %418 = vector.broadcast %66 : f32 to vector<8x128xf32>
    %419 = arith.mulf %220, %418 : vector<8x128xf32>
    %420 = arith.addf %417, %419 : vector<8x128xf32>
    %421 = vector.broadcast %76 : f32 to vector<8x128xf32>
    %422 = arith.mulf %233, %421 : vector<8x128xf32>
    %423 = arith.addf %420, %422 : vector<8x128xf32>
    %424 = vector.broadcast %86 : f32 to vector<8x128xf32>
    %425 = arith.mulf %246, %424 : vector<8x128xf32>
    %426 = arith.addf %423, %425 : vector<8x128xf32>
    %427 = vector.broadcast %96 : f32 to vector<8x128xf32>
    %428 = arith.mulf %259, %427 : vector<8x128xf32>
    %429 = arith.addf %426, %428 : vector<8x128xf32>
    %430 = vector.broadcast %106 : f32 to vector<8x128xf32>
    %431 = arith.mulf %272, %430 : vector<8x128xf32>
    %432 = arith.addf %429, %431 : vector<8x128xf32>
    %433 = vector.broadcast %116 : f32 to vector<8x128xf32>
    %434 = arith.mulf %285, %433 : vector<8x128xf32>
    %435 = arith.addf %432, %434 : vector<8x128xf32>
    %436 = vector.broadcast %126 : f32 to vector<8x128xf32>
    %437 = arith.mulf %298, %436 : vector<8x128xf32>
    %438 = arith.addf %435, %437 : vector<8x128xf32>
    %439 = vector.broadcast %136 : f32 to vector<8x128xf32>
    %440 = arith.addf %438, %439 : vector<8x128xf32>
    %cst_94 = arith.constant 0.000000e+00 : f32
    %441 = vector.broadcast %cst_94 : f32 to vector<8x128xf32>
    %442 = arith.cmpf ogt, %440, %441 : vector<8x128xf32>
    %443 = math.exp %440 : vector<8x128xf32>
    %cst_95 = arith.constant 1.000000e+00 : f32
    %444 = vector.broadcast %cst_95 : f32 to vector<8x128xf32>
    %445 = arith.subf %443, %444 : vector<8x128xf32>
    %446 = arith.select %442, %440, %445 : vector<8x128xi1>, vector<8x128xf32>
    %447 = vector.broadcast %37 : f32 to vector<8x128xf32>
    %448 = arith.mulf %181, %447 : vector<8x128xf32>
    %449 = vector.broadcast %47 : f32 to vector<8x128xf32>
    %450 = arith.mulf %194, %449 : vector<8x128xf32>
    %451 = arith.addf %448, %450 : vector<8x128xf32>
    %452 = vector.broadcast %57 : f32 to vector<8x128xf32>
    %453 = arith.mulf %207, %452 : vector<8x128xf32>
    %454 = arith.addf %451, %453 : vector<8x128xf32>
    %455 = vector.broadcast %67 : f32 to vector<8x128xf32>
    %456 = arith.mulf %220, %455 : vector<8x128xf32>
    %457 = arith.addf %454, %456 : vector<8x128xf32>
    %458 = vector.broadcast %77 : f32 to vector<8x128xf32>
    %459 = arith.mulf %233, %458 : vector<8x128xf32>
    %460 = arith.addf %457, %459 : vector<8x128xf32>
    %461 = vector.broadcast %87 : f32 to vector<8x128xf32>
    %462 = arith.mulf %246, %461 : vector<8x128xf32>
    %463 = arith.addf %460, %462 : vector<8x128xf32>
    %464 = vector.broadcast %97 : f32 to vector<8x128xf32>
    %465 = arith.mulf %259, %464 : vector<8x128xf32>
    %466 = arith.addf %463, %465 : vector<8x128xf32>
    %467 = vector.broadcast %107 : f32 to vector<8x128xf32>
    %468 = arith.mulf %272, %467 : vector<8x128xf32>
    %469 = arith.addf %466, %468 : vector<8x128xf32>
    %470 = vector.broadcast %117 : f32 to vector<8x128xf32>
    %471 = arith.mulf %285, %470 : vector<8x128xf32>
    %472 = arith.addf %469, %471 : vector<8x128xf32>
    %473 = vector.broadcast %127 : f32 to vector<8x128xf32>
    %474 = arith.mulf %298, %473 : vector<8x128xf32>
    %475 = arith.addf %472, %474 : vector<8x128xf32>
    %476 = vector.broadcast %137 : f32 to vector<8x128xf32>
    %477 = arith.addf %475, %476 : vector<8x128xf32>
    %cst_96 = arith.constant 0.000000e+00 : f32
    %478 = vector.broadcast %cst_96 : f32 to vector<8x128xf32>
    %479 = arith.cmpf ogt, %477, %478 : vector<8x128xf32>
    %480 = math.exp %477 : vector<8x128xf32>
    %cst_97 = arith.constant 1.000000e+00 : f32
    %481 = vector.broadcast %cst_97 : f32 to vector<8x128xf32>
    %482 = arith.subf %480, %481 : vector<8x128xf32>
    %483 = arith.select %479, %477, %482 : vector<8x128xi1>, vector<8x128xf32>
    %484 = vector.broadcast %38 : f32 to vector<8x128xf32>
    %485 = arith.mulf %181, %484 : vector<8x128xf32>
    %486 = vector.broadcast %48 : f32 to vector<8x128xf32>
    %487 = arith.mulf %194, %486 : vector<8x128xf32>
    %488 = arith.addf %485, %487 : vector<8x128xf32>
    %489 = vector.broadcast %58 : f32 to vector<8x128xf32>
    %490 = arith.mulf %207, %489 : vector<8x128xf32>
    %491 = arith.addf %488, %490 : vector<8x128xf32>
    %492 = vector.broadcast %68 : f32 to vector<8x128xf32>
    %493 = arith.mulf %220, %492 : vector<8x128xf32>
    %494 = arith.addf %491, %493 : vector<8x128xf32>
    %495 = vector.broadcast %78 : f32 to vector<8x128xf32>
    %496 = arith.mulf %233, %495 : vector<8x128xf32>
    %497 = arith.addf %494, %496 : vector<8x128xf32>
    %498 = vector.broadcast %88 : f32 to vector<8x128xf32>
    %499 = arith.mulf %246, %498 : vector<8x128xf32>
    %500 = arith.addf %497, %499 : vector<8x128xf32>
    %501 = vector.broadcast %98 : f32 to vector<8x128xf32>
    %502 = arith.mulf %259, %501 : vector<8x128xf32>
    %503 = arith.addf %500, %502 : vector<8x128xf32>
    %504 = vector.broadcast %108 : f32 to vector<8x128xf32>
    %505 = arith.mulf %272, %504 : vector<8x128xf32>
    %506 = arith.addf %503, %505 : vector<8x128xf32>
    %507 = vector.broadcast %118 : f32 to vector<8x128xf32>
    %508 = arith.mulf %285, %507 : vector<8x128xf32>
    %509 = arith.addf %506, %508 : vector<8x128xf32>
    %510 = vector.broadcast %128 : f32 to vector<8x128xf32>
    %511 = arith.mulf %298, %510 : vector<8x128xf32>
    %512 = arith.addf %509, %511 : vector<8x128xf32>
    %513 = vector.broadcast %138 : f32 to vector<8x128xf32>
    %514 = arith.addf %512, %513 : vector<8x128xf32>
    %cst_98 = arith.constant 0.000000e+00 : f32
    %515 = vector.broadcast %cst_98 : f32 to vector<8x128xf32>
    %516 = arith.cmpf ogt, %514, %515 : vector<8x128xf32>
    %517 = math.exp %514 : vector<8x128xf32>
    %cst_99 = arith.constant 1.000000e+00 : f32
    %518 = vector.broadcast %cst_99 : f32 to vector<8x128xf32>
    %519 = arith.subf %517, %518 : vector<8x128xf32>
    %520 = arith.select %516, %514, %519 : vector<8x128xi1>, vector<8x128xf32>
    %521 = vector.broadcast %39 : f32 to vector<8x128xf32>
    %522 = arith.mulf %181, %521 : vector<8x128xf32>
    %523 = vector.broadcast %49 : f32 to vector<8x128xf32>
    %524 = arith.mulf %194, %523 : vector<8x128xf32>
    %525 = arith.addf %522, %524 : vector<8x128xf32>
    %526 = vector.broadcast %59 : f32 to vector<8x128xf32>
    %527 = arith.mulf %207, %526 : vector<8x128xf32>
    %528 = arith.addf %525, %527 : vector<8x128xf32>
    %529 = vector.broadcast %69 : f32 to vector<8x128xf32>
    %530 = arith.mulf %220, %529 : vector<8x128xf32>
    %531 = arith.addf %528, %530 : vector<8x128xf32>
    %532 = vector.broadcast %79 : f32 to vector<8x128xf32>
    %533 = arith.mulf %233, %532 : vector<8x128xf32>
    %534 = arith.addf %531, %533 : vector<8x128xf32>
    %535 = vector.broadcast %89 : f32 to vector<8x128xf32>
    %536 = arith.mulf %246, %535 : vector<8x128xf32>
    %537 = arith.addf %534, %536 : vector<8x128xf32>
    %538 = vector.broadcast %99 : f32 to vector<8x128xf32>
    %539 = arith.mulf %259, %538 : vector<8x128xf32>
    %540 = arith.addf %537, %539 : vector<8x128xf32>
    %541 = vector.broadcast %109 : f32 to vector<8x128xf32>
    %542 = arith.mulf %272, %541 : vector<8x128xf32>
    %543 = arith.addf %540, %542 : vector<8x128xf32>
    %544 = vector.broadcast %119 : f32 to vector<8x128xf32>
    %545 = arith.mulf %285, %544 : vector<8x128xf32>
    %546 = arith.addf %543, %545 : vector<8x128xf32>
    %547 = vector.broadcast %129 : f32 to vector<8x128xf32>
    %548 = arith.mulf %298, %547 : vector<8x128xf32>
    %549 = arith.addf %546, %548 : vector<8x128xf32>
    %550 = vector.broadcast %139 : f32 to vector<8x128xf32>
    %551 = arith.addf %549, %550 : vector<8x128xf32>
    %cst_100 = arith.constant 0.000000e+00 : f32
    %552 = vector.broadcast %cst_100 : f32 to vector<8x128xf32>
    %553 = arith.cmpf ogt, %551, %552 : vector<8x128xf32>
    %554 = math.exp %551 : vector<8x128xf32>
    %cst_101 = arith.constant 1.000000e+00 : f32
    %555 = vector.broadcast %cst_101 : f32 to vector<8x128xf32>
    %556 = arith.subf %554, %555 : vector<8x128xf32>
    %557 = arith.select %553, %551, %556 : vector<8x128xi1>, vector<8x128xf32>
    %558 = vector.broadcast %40 : f32 to vector<8x128xf32>
    %559 = arith.mulf %181, %558 : vector<8x128xf32>
    %560 = vector.broadcast %50 : f32 to vector<8x128xf32>
    %561 = arith.mulf %194, %560 : vector<8x128xf32>
    %562 = arith.addf %559, %561 : vector<8x128xf32>
    %563 = vector.broadcast %60 : f32 to vector<8x128xf32>
    %564 = arith.mulf %207, %563 : vector<8x128xf32>
    %565 = arith.addf %562, %564 : vector<8x128xf32>
    %566 = vector.broadcast %70 : f32 to vector<8x128xf32>
    %567 = arith.mulf %220, %566 : vector<8x128xf32>
    %568 = arith.addf %565, %567 : vector<8x128xf32>
    %569 = vector.broadcast %80 : f32 to vector<8x128xf32>
    %570 = arith.mulf %233, %569 : vector<8x128xf32>
    %571 = arith.addf %568, %570 : vector<8x128xf32>
    %572 = vector.broadcast %90 : f32 to vector<8x128xf32>
    %573 = arith.mulf %246, %572 : vector<8x128xf32>
    %574 = arith.addf %571, %573 : vector<8x128xf32>
    %575 = vector.broadcast %100 : f32 to vector<8x128xf32>
    %576 = arith.mulf %259, %575 : vector<8x128xf32>
    %577 = arith.addf %574, %576 : vector<8x128xf32>
    %578 = vector.broadcast %110 : f32 to vector<8x128xf32>
    %579 = arith.mulf %272, %578 : vector<8x128xf32>
    %580 = arith.addf %577, %579 : vector<8x128xf32>
    %581 = vector.broadcast %120 : f32 to vector<8x128xf32>
    %582 = arith.mulf %285, %581 : vector<8x128xf32>
    %583 = arith.addf %580, %582 : vector<8x128xf32>
    %584 = vector.broadcast %130 : f32 to vector<8x128xf32>
    %585 = arith.mulf %298, %584 : vector<8x128xf32>
    %586 = arith.addf %583, %585 : vector<8x128xf32>
    %587 = vector.broadcast %140 : f32 to vector<8x128xf32>
    %588 = arith.addf %586, %587 : vector<8x128xf32>
    %cst_102 = arith.constant 0.000000e+00 : f32
    %589 = vector.broadcast %cst_102 : f32 to vector<8x128xf32>
    %590 = arith.cmpf ogt, %588, %589 : vector<8x128xf32>
    %591 = math.exp %588 : vector<8x128xf32>
    %cst_103 = arith.constant 1.000000e+00 : f32
    %592 = vector.broadcast %cst_103 : f32 to vector<8x128xf32>
    %593 = arith.subf %591, %592 : vector<8x128xf32>
    %594 = arith.select %590, %588, %593 : vector<8x128xi1>, vector<8x128xf32>
    %595 = vector.broadcast %41 : f32 to vector<8x128xf32>
    %596 = arith.mulf %181, %595 : vector<8x128xf32>
    %597 = vector.broadcast %51 : f32 to vector<8x128xf32>
    %598 = arith.mulf %194, %597 : vector<8x128xf32>
    %599 = arith.addf %596, %598 : vector<8x128xf32>
    %600 = vector.broadcast %61 : f32 to vector<8x128xf32>
    %601 = arith.mulf %207, %600 : vector<8x128xf32>
    %602 = arith.addf %599, %601 : vector<8x128xf32>
    %603 = vector.broadcast %71 : f32 to vector<8x128xf32>
    %604 = arith.mulf %220, %603 : vector<8x128xf32>
    %605 = arith.addf %602, %604 : vector<8x128xf32>
    %606 = vector.broadcast %81 : f32 to vector<8x128xf32>
    %607 = arith.mulf %233, %606 : vector<8x128xf32>
    %608 = arith.addf %605, %607 : vector<8x128xf32>
    %609 = vector.broadcast %91 : f32 to vector<8x128xf32>
    %610 = arith.mulf %246, %609 : vector<8x128xf32>
    %611 = arith.addf %608, %610 : vector<8x128xf32>
    %612 = vector.broadcast %101 : f32 to vector<8x128xf32>
    %613 = arith.mulf %259, %612 : vector<8x128xf32>
    %614 = arith.addf %611, %613 : vector<8x128xf32>
    %615 = vector.broadcast %111 : f32 to vector<8x128xf32>
    %616 = arith.mulf %272, %615 : vector<8x128xf32>
    %617 = arith.addf %614, %616 : vector<8x128xf32>
    %618 = vector.broadcast %121 : f32 to vector<8x128xf32>
    %619 = arith.mulf %285, %618 : vector<8x128xf32>
    %620 = arith.addf %617, %619 : vector<8x128xf32>
    %621 = vector.broadcast %131 : f32 to vector<8x128xf32>
    %622 = arith.mulf %298, %621 : vector<8x128xf32>
    %623 = arith.addf %620, %622 : vector<8x128xf32>
    %624 = vector.broadcast %141 : f32 to vector<8x128xf32>
    %625 = arith.addf %623, %624 : vector<8x128xf32>
    %cst_104 = arith.constant 0.000000e+00 : f32
    %626 = vector.broadcast %cst_104 : f32 to vector<8x128xf32>
    %627 = arith.cmpf ogt, %625, %626 : vector<8x128xf32>
    %628 = math.exp %625 : vector<8x128xf32>
    %cst_105 = arith.constant 1.000000e+00 : f32
    %629 = vector.broadcast %cst_105 : f32 to vector<8x128xf32>
    %630 = arith.subf %628, %629 : vector<8x128xf32>
    %631 = arith.select %627, %625, %630 : vector<8x128xi1>, vector<8x128xf32>
    %632 = vector.broadcast %42 : f32 to vector<8x128xf32>
    %633 = arith.mulf %181, %632 : vector<8x128xf32>
    %634 = vector.broadcast %52 : f32 to vector<8x128xf32>
    %635 = arith.mulf %194, %634 : vector<8x128xf32>
    %636 = arith.addf %633, %635 : vector<8x128xf32>
    %637 = vector.broadcast %62 : f32 to vector<8x128xf32>
    %638 = arith.mulf %207, %637 : vector<8x128xf32>
    %639 = arith.addf %636, %638 : vector<8x128xf32>
    %640 = vector.broadcast %72 : f32 to vector<8x128xf32>
    %641 = arith.mulf %220, %640 : vector<8x128xf32>
    %642 = arith.addf %639, %641 : vector<8x128xf32>
    %643 = vector.broadcast %82 : f32 to vector<8x128xf32>
    %644 = arith.mulf %233, %643 : vector<8x128xf32>
    %645 = arith.addf %642, %644 : vector<8x128xf32>
    %646 = vector.broadcast %92 : f32 to vector<8x128xf32>
    %647 = arith.mulf %246, %646 : vector<8x128xf32>
    %648 = arith.addf %645, %647 : vector<8x128xf32>
    %649 = vector.broadcast %102 : f32 to vector<8x128xf32>
    %650 = arith.mulf %259, %649 : vector<8x128xf32>
    %651 = arith.addf %648, %650 : vector<8x128xf32>
    %652 = vector.broadcast %112 : f32 to vector<8x128xf32>
    %653 = arith.mulf %272, %652 : vector<8x128xf32>
    %654 = arith.addf %651, %653 : vector<8x128xf32>
    %655 = vector.broadcast %122 : f32 to vector<8x128xf32>
    %656 = arith.mulf %285, %655 : vector<8x128xf32>
    %657 = arith.addf %654, %656 : vector<8x128xf32>
    %658 = vector.broadcast %132 : f32 to vector<8x128xf32>
    %659 = arith.mulf %298, %658 : vector<8x128xf32>
    %660 = arith.addf %657, %659 : vector<8x128xf32>
    %661 = vector.broadcast %142 : f32 to vector<8x128xf32>
    %662 = arith.addf %660, %661 : vector<8x128xf32>
    %cst_106 = arith.constant 0.000000e+00 : f32
    %663 = vector.broadcast %cst_106 : f32 to vector<8x128xf32>
    %664 = arith.cmpf ogt, %662, %663 : vector<8x128xf32>
    %665 = math.exp %662 : vector<8x128xf32>
    %cst_107 = arith.constant 1.000000e+00 : f32
    %666 = vector.broadcast %cst_107 : f32 to vector<8x128xf32>
    %667 = arith.subf %665, %666 : vector<8x128xf32>
    %668 = arith.select %664, %662, %667 : vector<8x128xi1>, vector<8x128xf32>
    %669 = vector.broadcast %143 : f32 to vector<8x128xf32>
    %670 = arith.mulf %335, %669 : vector<8x128xf32>
    %671 = vector.broadcast %145 : f32 to vector<8x128xf32>
    %672 = arith.mulf %372, %671 : vector<8x128xf32>
    %673 = arith.addf %670, %672 : vector<8x128xf32>
    %674 = vector.broadcast %147 : f32 to vector<8x128xf32>
    %675 = arith.mulf %409, %674 : vector<8x128xf32>
    %676 = arith.addf %673, %675 : vector<8x128xf32>
    %677 = vector.broadcast %149 : f32 to vector<8x128xf32>
    %678 = arith.mulf %446, %677 : vector<8x128xf32>
    %679 = arith.addf %676, %678 : vector<8x128xf32>
    %680 = vector.broadcast %151 : f32 to vector<8x128xf32>
    %681 = arith.mulf %483, %680 : vector<8x128xf32>
    %682 = arith.addf %679, %681 : vector<8x128xf32>
    %683 = vector.broadcast %153 : f32 to vector<8x128xf32>
    %684 = arith.mulf %520, %683 : vector<8x128xf32>
    %685 = arith.addf %682, %684 : vector<8x128xf32>
    %686 = vector.broadcast %155 : f32 to vector<8x128xf32>
    %687 = arith.mulf %557, %686 : vector<8x128xf32>
    %688 = arith.addf %685, %687 : vector<8x128xf32>
    %689 = vector.broadcast %157 : f32 to vector<8x128xf32>
    %690 = arith.mulf %594, %689 : vector<8x128xf32>
    %691 = arith.addf %688, %690 : vector<8x128xf32>
    %692 = vector.broadcast %159 : f32 to vector<8x128xf32>
    %693 = arith.mulf %631, %692 : vector<8x128xf32>
    %694 = arith.addf %691, %693 : vector<8x128xf32>
    %695 = vector.broadcast %161 : f32 to vector<8x128xf32>
    %696 = arith.mulf %668, %695 : vector<8x128xf32>
    %697 = arith.addf %694, %696 : vector<8x128xf32>
    %698 = vector.broadcast %163 : f32 to vector<8x128xf32>
    %699 = arith.addf %697, %698 : vector<8x128xf32>
    %cst_108 = arith.constant 0.000000e+00 : f32
    %700 = vector.broadcast %cst_108 : f32 to vector<8x128xf32>
    %701 = arith.cmpf ogt, %699, %700 : vector<8x128xf32>
    %702 = math.exp %699 : vector<8x128xf32>
    %cst_109 = arith.constant 1.000000e+00 : f32
    %703 = vector.broadcast %cst_109 : f32 to vector<8x128xf32>
    %704 = arith.subf %702, %703 : vector<8x128xf32>
    %705 = arith.select %701, %699, %704 : vector<8x128xi1>, vector<8x128xf32>
    %706 = vector.broadcast %144 : f32 to vector<8x128xf32>
    %707 = arith.mulf %335, %706 : vector<8x128xf32>
    %708 = vector.broadcast %146 : f32 to vector<8x128xf32>
    %709 = arith.mulf %372, %708 : vector<8x128xf32>
    %710 = arith.addf %707, %709 : vector<8x128xf32>
    %711 = vector.broadcast %148 : f32 to vector<8x128xf32>
    %712 = arith.mulf %409, %711 : vector<8x128xf32>
    %713 = arith.addf %710, %712 : vector<8x128xf32>
    %714 = vector.broadcast %150 : f32 to vector<8x128xf32>
    %715 = arith.mulf %446, %714 : vector<8x128xf32>
    %716 = arith.addf %713, %715 : vector<8x128xf32>
    %717 = vector.broadcast %152 : f32 to vector<8x128xf32>
    %718 = arith.mulf %483, %717 : vector<8x128xf32>
    %719 = arith.addf %716, %718 : vector<8x128xf32>
    %720 = vector.broadcast %154 : f32 to vector<8x128xf32>
    %721 = arith.mulf %520, %720 : vector<8x128xf32>
    %722 = arith.addf %719, %721 : vector<8x128xf32>
    %723 = vector.broadcast %156 : f32 to vector<8x128xf32>
    %724 = arith.mulf %557, %723 : vector<8x128xf32>
    %725 = arith.addf %722, %724 : vector<8x128xf32>
    %726 = vector.broadcast %158 : f32 to vector<8x128xf32>
    %727 = arith.mulf %594, %726 : vector<8x128xf32>
    %728 = arith.addf %725, %727 : vector<8x128xf32>
    %729 = vector.broadcast %160 : f32 to vector<8x128xf32>
    %730 = arith.mulf %631, %729 : vector<8x128xf32>
    %731 = arith.addf %728, %730 : vector<8x128xf32>
    %732 = vector.broadcast %162 : f32 to vector<8x128xf32>
    %733 = arith.mulf %668, %732 : vector<8x128xf32>
    %734 = arith.addf %731, %733 : vector<8x128xf32>
    %735 = vector.broadcast %164 : f32 to vector<8x128xf32>
    %736 = arith.addf %734, %735 : vector<8x128xf32>
    %cst_110 = arith.constant 0.000000e+00 : f32
    %737 = vector.broadcast %cst_110 : f32 to vector<8x128xf32>
    %738 = arith.cmpf ogt, %736, %737 : vector<8x128xf32>
    %739 = math.exp %736 : vector<8x128xf32>
    %cst_111 = arith.constant 1.000000e+00 : f32
    %740 = vector.broadcast %cst_111 : f32 to vector<8x128xf32>
    %741 = arith.subf %739, %740 : vector<8x128xf32>
    %742 = arith.select %738, %736, %741 : vector<8x128xi1>, vector<8x128xf32>
    %c0_112 = arith.constant 0 : index
    %c0_113 = arith.constant 0 : index
    %c0_114 = arith.constant 0 : index
    %743 = vector.load %arg10[%c0_112, %c0_113, %c0_114] : memref<2x8x128xf32, #tpu.memory_space<vmem>>, vector<1x8x128xf32>
    %744 = vector.shape_cast %743 : vector<1x8x128xf32> to vector<8x128xf32>
    %745 = vector.shape_cast %705 : vector<8x128xf32> to vector<1x8x128xf32>
    tpu.vector_store %arg10[%c0_112, %c0_113, %c0_114], %745 {strides = array<i32>} : memref<2x8x128xf32, #tpu.memory_space<vmem>>, vector<1x8x128xf32>,
    %c1_115 = arith.constant 1 : index
    %c0_116 = arith.constant 0 : index
    %c0_117 = arith.constant 0 : index
    %746 = vector.load %arg10[%c1_115, %c0_116, %c0_117] : memref<2x8x128xf32, #tpu.memory_space<vmem>>, vector<1x8x128xf32>
    %747 = vector.shape_cast %746 : vector<1x8x128xf32> to vector<8x128xf32>
    %748 = vector.shape_cast %742 : vector<8x128xf32> to vector<1x8x128xf32>
    tpu.vector_store %arg10[%c1_115, %c0_116, %c0_117], %748 {strides = array<i32>} : memref<2x8x128xf32, #tpu.memory_space<vmem>>, vector<1x8x128xf32>,
    %c1_i32 = arith.constant 1 : i32
    %749 = arith.muli %arg0, %c1_i32 : i32
    %750 = arith.addi %749, %arg1 : i32
    %c1024_i32 = arith.constant 1024 : i32
    %751 = arith.muli %750, %c1024_i32 : i32
    %752 = tpu.iota {dimensions = array<i32: 0>} : vector<8x128xi32>
    %753 = tpu.iota {dimensions = array<i32: 1>} : vector<8x128xi32>
    %c128_i32 = arith.constant 128 : i32
    %754 = vector.broadcast %c128_i32 : i32 to vector<8x128xi32>
    %755 = arith.muli %752, %754 : vector<8x128xi32>
    %756 = vector.broadcast %751 : i32 to vector<8x128xi32>
    %757 = arith.addi %756, %755 : vector<8x128xi32>
    %758 = arith.addi %757, %753 : vector<8x128xi32>
    %c0_118 = arith.constant 0 : index
    %759 = memref.load %arg3[%c0_118] : memref<1xi32, #tpu.memory_space<smem>>
    %760 = vector.broadcast %759 : i32 to vector<8x128xi32>
    %761 = arith.cmpi slt, %758, %760 : vector<8x128xi32>
    %c0_119 = arith.constant 0 : index
    %c0_120 = arith.constant 0 : index
    %762 = vector.load %arg11[%c0_119, %c0_120] : memref<8x128xf32, #tpu.memory_space<vmem>>, vector<8x128xf32>
    %763 = arith.addf %705, %742 : vector<8x128xf32>
    %cst_121 = arith.constant 0.000000e+00 : f32
    %764 = vector.broadcast %cst_121 : f32 to vector<8x128xf32>
    %765 = arith.select %761, %763, %764 : vector<8x128xi1>, vector<8x128xf32>
    %766 = arith.addf %762, %765 : vector<8x128xf32>
    %c0_122 = arith.constant 0 : index
    %c0_123 = arith.constant 0 : index
    %767 = vector.load %arg11[%c0_122, %c0_123] : memref<8x128xf32, #tpu.memory_space<vmem>>, vector<8x128xf32>
    tpu.vector_store %arg11[%c0_122, %c0_123], %766 {strides = array<i32>} : memref<8x128xf32, #tpu.memory_space<vmem>>, vector<8x128xf32>,
    %c0_124 = arith.constant 0 : index
    %c0_125 = arith.constant 0 : index
    %768 = vector.load %arg12[%c0_124, %c0_125] : memref<8x128xf32, #tpu.memory_space<vmem>>, vector<8x128xf32>
    %769 = arith.mulf %705, %705 : vector<8x128xf32>
    %770 = arith.mulf %742, %742 : vector<8x128xf32>
    %771 = arith.addf %769, %770 : vector<8x128xf32>
    %cst_126 = arith.constant 0.000000e+00 : f32
    %772 = vector.broadcast %cst_126 : f32 to vector<8x128xf32>
    %773 = arith.select %761, %771, %772 : vector<8x128xi1>, vector<8x128xf32>
    %774 = arith.addf %768, %773 : vector<8x128xf32>
    %c0_127 = arith.constant 0 : index
    %c0_128 = arith.constant 0 : index
    %775 = vector.load %arg12[%c0_127, %c0_128] : memref<8x128xf32, #tpu.memory_space<vmem>>, vector<8x128xf32>
    tpu.vector_store %arg12[%c0_127, %c0_128], %774 {strides = array<i32>} : memref<8x128xf32, #tpu.memory_space<vmem>>, vector<8x128xf32>,
    return
  }
  func.func @transform_0(%arg0: i32, %arg1: i32) -> (i32, i32, i32) {
    %c1_i32 = arith.constant 1 : i32
    %0 = arith.muli %arg0, %c1_i32 : i32
    %1 = arith.addi %0, %arg1 : i32
    %c0_i32 = arith.constant 0 : i32
    %c0_i32_0 = arith.constant 0 : i32
    %c0_i32_1 = arith.constant 0 : i32
    return %c0_i32, %1, %c0_i32_0 : i32, i32, i32
  }
  func.func @transform_1(%arg0: i32, %arg1: i32) -> i32 {
    %c0_i32 = arith.constant 0 : i32
    %c0_i32_0 = arith.constant 0 : i32
    return %c0_i32 : i32
  }
  func.func @transform_2(%arg0: i32, %arg1: i32) -> i32 {
    %c0_i32 = arith.constant 0 : i32
    %c0_i32_0 = arith.constant 0 : i32
    return %c0_i32 : i32
  }
  func.func @transform_3(%arg0: i32, %arg1: i32) -> i32 {
    %c0_i32 = arith.constant 0 : i32
    %c0_i32_0 = arith.constant 0 : i32
    return %c0_i32 : i32
  }
  func.func @transform_4(%arg0: i32, %arg1: i32) -> i32 {
    %c0_i32 = arith.constant 0 : i32
    %c0_i32_0 = arith.constant 0 : i32
    return %c0_i32 : i32
  }
  func.func @transform_5(%arg0: i32, %arg1: i32) -> i32 {
    %c0_i32 = arith.constant 0 : i32
    %c0_i32_0 = arith.constant 0 : i32
    return %c0_i32 : i32
  }
  func.func @transform_6(%arg0: i32, %arg1: i32) -> i32 {
    %c0_i32 = arith.constant 0 : i32
    %c0_i32_0 = arith.constant 0 : i32
    return %c0_i32 : i32
  }
  func.func @transform_7(%arg0: i32, %arg1: i32) -> i32 {
    %c0_i32 = arith.constant 0 : i32
    %c0_i32_0 = arith.constant 0 : i32
    return %c0_i32 : i32
  }
  func.func @transform_8(%arg0: i32, %arg1: i32) -> (i32, i32, i32) {
    %c1_i32 = arith.constant 1 : i32
    %0 = arith.muli %arg0, %c1_i32 : i32
    %1 = arith.addi %0, %arg1 : i32
    %c0_i32 = arith.constant 0 : i32
    %c0_i32_0 = arith.constant 0 : i32
    %c0_i32_1 = arith.constant 0 : i32
    return %c0_i32, %1, %c0_i32_0 : i32, i32, i32
  }
  func.func @transform_9(%arg0: i32, %arg1: i32) -> (i32, i32) {
    %c0_i32 = arith.constant 0 : i32
    %c0_i32_0 = arith.constant 0 : i32
    return %arg0, %c0_i32 : i32, i32
  }
  func.func @transform_10(%arg0: i32, %arg1: i32) -> (i32, i32) {
    %c0_i32 = arith.constant 0 : i32
    %c0_i32_0 = arith.constant 0 : i32
    return %arg0, %c0_i32 : i32, i32
  }
}

</mosaic_0001>

<llo_original>
// kernel: modulator_forward.1
$region0: #{modulator_forward.1}
  #allocation0 [shape = 'u32[]', space=smem, size = 0x4, offset = 0x4, fixed_abs, tag = 'smem constant byte address 0x4 - core index']
  #allocation1 [shape = 'u32[144,128]{1,0:T(1,128)}', space=vmem, size = 0x12000, scoped, tag = 'internal scratch']
  #allocation2 [shape = 's32[1]{0:T(128)S(6)}', space=smem, size = 0x200, scoped, tag = 'scoped memory for modulator_forward.1']
  %s0 = inlined_call_operand.vmem [shape: f32[2,8,128], index: 0, kind: input, shape index: {}]
  %s1 = inlined_call_operand.<no memory space> [shape: s32[1], index: 1, kind: input, shape index: {}]
  %s2 = inlined_call_operand.vmem [shape: f32[20], index: 2, kind: input, shape index: {}]
  %s3 = inlined_call_operand.vmem [shape: f32[10], index: 3, kind: input, shape index: {}]
  %s4 = inlined_call_operand.vmem [shape: f32[100], index: 4, kind: input, shape index: {}]
  %s5 = inlined_call_operand.vmem [shape: f32[10], index: 5, kind: input, shape index: {}]
  %s6 = inlined_call_operand.vmem [shape: f32[20], index: 6, kind: input, shape index: {}]
  %s7 = inlined_call_operand.vmem [shape: f32[2], index: 7, kind: input, shape index: {}]
  %s8 = inlined_call_operand.vmem [shape: f32[2,8,128], index: 8, kind: output, shape index: {0}]
  %s9 = inlined_call_operand.vmem [shape: f32[8,128], index: 9, kind: output, shape index: {1}]
  %s10 = inlined_call_operand.vmem [shape: f32[8,128], index: 10, kind: output, shape index: {2}]
  %11 = xla_tuple %s8, %s9, %s10
  %s12 = sld [smem:[#allocation0]]
  $region86: #{modulator_forward.1} parent=0
    _
  %s14 = ssub.s32 1, %s12
  %s15 = scalar_select 0, %s14, %s12
  %16 = sst [smem:[#allocation2]] %s1
  $region1: #{modulator_forward.1} parent=0
    #allocation3 [shape = 'u8[512]{0}', space=smem, size = 0x200, scoped, tag = 'input window, operand 2, single buffered']
    #allocation4 [shape = 's32[1]{0}', space=sflag, size = 0x4, scoped, tag = 'scoped memory for modulator_forward.1']
    #allocation5 [shape = 'u8[512]{0}', space=smem, size = 0x200, scoped, tag = 'input window, operand 3, single buffered']
    #allocation6 [shape = 's32[1]{0}', space=sflag, size = 0x4, scoped, tag = 'scoped memory for modulator_forward.1']
    #allocation7 [shape = 'u8[512]{0}', space=smem, size = 0x200, scoped, tag = 'input window, operand 4, single buffered']
    #allocation8 [shape = 'u8[512]{0}', space=smem, size = 0x200, scoped, tag = 'input window, operand 5, single buffered']
    #allocation9 [shape = 's32[1]{0}', space=sflag, size = 0x4, scoped, tag = 'scoped memory for modulator_forward.1']
    #allocation10 [shape = 'u8[512]{0}', space=smem, size = 0x200, scoped, tag = 'input window, operand 6, single buffered']
    #allocation11 [shape = 'u8[512]{0}', space=smem, size = 0x200, scoped, tag = 'input window, operand 7, single buffered']
    #allocation12 [shape = 's32[1]{0}', space=sflag, size = 0x4, scoped, tag = 'scoped memory for modulator_forward.1']
    %17 = vsyncpa [#allocation4], 0
    %18 = vsyncpa [#allocation6], 0
    %19 = vsyncpa [#allocation9], 0
    %20 = vsyncpa [#allocation12], 0
    // Predicated region
    $region2: #{modulator_forward.1} parent=1 // pred_check
      _
    $region3: #{modulator_forward.1} parent=1 // pred_check_branch
      %22 = sbr.rel (0) target = $region5
    $region4: #{modulator_forward.1} parent=1 // pred_region
      %s23 = sadd.s32 0, 0
      %p24 = scmp.lt.s32.totalorder %s23, 0
      %s25 = scalar_select %p24, %s23, 0
      %s26 = smul.addr %s25, 8
      %s27 = scalar_lea.vmem %s0, %s26
      %s28 = sadd.s32 0, 0
    $region5: #{modulator_forward.1} parent=1 // pred_fallthru
      _
    // Predicated region
    $region6: #{modulator_forward.1} parent=1 // pred_check
      _
    $region7: #{modulator_forward.1} parent=1 // pred_check_branch
      %30 = sbr.rel (0) target = $region9
    $region8: #{modulator_forward.1} parent=1 // pred_region
      _
    $region9: #{modulator_forward.1} parent=1 // pred_fallthru
      _
    // Predicated region
    $region10: #{modulator_forward.1} parent=1 // pred_check
      _
    $region11: #{modulator_forward.1} parent=1 // pred_check_branch
      %32 = sbr.rel (0) target = $region13
    $region12: #{modulator_forward.1} parent=1 // pred_region
      %s34 = ssub.s32 16, 16
      %35 = vsyncadd [#allocation4], %s34
      %s37 = sshll.u32 %s2, 4
      %s38 = int_to_ptr.vmem [resolvable:$true] %s37
      %40 = dma.vmem_to_smem %s38, 16, [#allocation3], [#allocation4]
    $region13: #{modulator_forward.1} parent=1 // pred_fallthru
      _
    // Predicated region
    $region14: #{modulator_forward.1} parent=1 // pred_check
      _
    $region15: #{modulator_forward.1} parent=1 // pred_check_branch
      %42 = sbr.rel (0) target = $region17
    $region16: #{modulator_forward.1} parent=1 // pred_region
      %s44 = ssub.s32 16, 16
      %45 = vsyncadd [#allocation6], %s44
      %s47 = sshll.u32 %s3, 4
      %s48 = int_to_ptr.vmem [resolvable:$true] %s47
      %50 = dma.vmem_to_smem %s48, 16, [#allocation5], [#allocation6]
    $region17: #{modulator_forward.1} parent=1 // pred_fallthru
      _
    // Predicated region
    $region18: #{modulator_forward.1} parent=1 // pred_check
      _
    $region19: #{modulator_forward.1} parent=1 // pred_check_branch
      %52 = sbr.rel (0) target = $region21
    $region20: #{modulator_forward.1} parent=1 // pred_region
      %s54 = ssub.s32 16, 16
      %55 = vsyncadd [#allocation6], %s54
      %s57 = sshll.u32 %s4, 4
      %s58 = int_to_ptr.vmem [resolvable:$true] %s57
      %60 = dma.vmem_to_smem %s58, 16, [#allocation7], [#allocation6]
    $region21: #{modulator_forward.1} parent=1 // pred_fallthru
      _
    // Predicated region
    $region22: #{modulator_forward.1} parent=1 // pred_check
      _
    $region23: #{modulator_forward.1} parent=1 // pred_check_branch
      %62 = sbr.rel (0) target = $region25
    $region24: #{modulator_forward.1} parent=1 // pred_region
      %s64 = ssub.s32 16, 16
      %65 = vsyncadd [#allocation9], %s64
      %s67 = sshll.u32 %s5, 4
      %s68 = int_to_ptr.vmem [resolvable:$true] %s67
      %70 = dma.vmem_to_smem %s68, 16, [#allocation8], [#allocation9]
    $region25: #{modulator_forward.1} parent=1 // pred_fallthru
      _
    // Predicated region
    $region26: #{modulator_forward.1} parent=1 // pred_check
      _
    $region27: #{modulator_forward.1} parent=1 // pred_check_branch
      %72 = sbr.rel (0) target = $region29
    $region28: #{modulator_forward.1} parent=1 // pred_region
      %s74 = ssub.s32 16, 16
      %75 = vsyncadd [#allocation9], %s74
      %s77 = sshll.u32 %s6, 4
      %s78 = int_to_ptr.vmem [resolvable:$true] %s77
      %80 = dma.vmem_to_smem %s78, 16, [#allocation10], [#allocation9]
    $region29: #{modulator_forward.1} parent=1 // pred_fallthru
      _
    // Predicated region
    $region30: #{modulator_forward.1} parent=1 // pred_check
      _
    $region31: #{modulator_forward.1} parent=1 // pred_check_branch
      %82 = sbr.rel (0) target = $region33
    $region32: #{modulator_forward.1} parent=1 // pred_region
      %s84 = ssub.s32 16, 16
      %85 = vsyncadd [#allocation12], %s84
      %s87 = sshll.u32 %s7, 4
      %s88 = int_to_ptr.vmem [resolvable:$true] %s87
      %90 = dma.vmem_to_smem %s88, 16, [#allocation11], [#allocation12]
    $region33: #{modulator_forward.1} parent=1 // pred_fallthru
      _
    // Predicated region
    $region34: #{modulator_forward.1} parent=1 // pred_check
      _
    $region35: #{modulator_forward.1} parent=1 // pred_check_branch
      %92 = sbr.rel (0) target = $region37
    $region36: #{modulator_forward.1} parent=1 // pred_region
      %93 = dma.done [#allocation4], 16
    $region37: #{modulator_forward.1} parent=1 // pred_fallthru
      _
    // Predicated region
    $region38: #{modulator_forward.1} parent=1 // pred_check
      _
    $region39: #{modulator_forward.1} parent=1 // pred_check_branch
      %95 = sbr.rel (0) target = $region41
    $region40: #{modulator_forward.1} parent=1 // pred_region
      %96 = dma.done [#allocation6], 16
    $region41: #{modulator_forward.1} parent=1 // pred_fallthru
      _
    // Predicated region
    $region42: #{modulator_forward.1} parent=1 // pred_check
      _
    $region43: #{modulator_forward.1} parent=1 // pred_check_branch
      %98 = sbr.rel (0) target = $region45
    $region44: #{modulator_forward.1} parent=1 // pred_region
      %99 = dma.done [#allocation6], 16
    $region45: #{modulator_forward.1} parent=1 // pred_fallthru
      _
    // Predicated region
    $region46: #{modulator_forward.1} parent=1 // pred_check
      _
    $region47: #{modulator_forward.1} parent=1 // pred_check_branch
      %101 = sbr.rel (0) target = $region49
    $region48: #{modulator_forward.1} parent=1 // pred_region
      %102 = dma.done [#allocation9], 16
    $region49: #{modulator_forward.1} parent=1 // pred_fallthru
      _
    // Predicated region
    $region50: #{modulator_forward.1} parent=1 // pred_check
      _
    $region51: #{modulator_forward.1} parent=1 // pred_check_branch
      %104 = sbr.rel (0) target = $region53
    $region52: #{modulator_forward.1} parent=1 // pred_region
      %105 = dma.done [#allocation9], 16
    $region53: #{modulator_forward.1} parent=1 // pred_fallthru
      _
    // Predicated region
    $region54: #{modulator_forward.1} parent=1 // pred_check
      _
    $region55: #{modulator_forward.1} parent=1 // pred_check_branch
      %107 = sbr.rel (0) target = $region57
    $region56: #{modulator_forward.1} parent=1 // pred_region
      %108 = dma.done [#allocation12], 16
    $region57: #{modulator_forward.1} parent=1 // pred_fallthru
      _
    %109 = sfence
    %s110 = sadd.s32 0, 0
    %p111 = scmp.lt.s32.totalorder %s110, 0
    %s112 = scalar_select %p111, %s110, 0
    %s113 = smul.addr %s112, 8
    %s114 = scalar_lea.vmem %s0, %s113
    %s115 = sadd.s32 0, 0
    %p116 = scmp.lt.s32.totalorder %s115, 0
    %s117 = scalar_select %p116, %s115, 0
    %s118 = smul.addr %s117, 8
    %s119 = scalar_lea.vmem %s8, %s118
    %s120 = sadd.s32 0, 0
    %p121 = scmp.lt.s32.totalorder %s120, 0
    %s122 = scalar_select %p121, %s120, 0
    %s123 = smul.addr %s122, 8
    %s124 = scalar_lea.vmem %s0, %s123
    %s125 = sadd.s32 0, 0
    %s126 = sadd.s32 0, 0
    %p127 = scmp.lt.s32.totalorder %s126, 0
    %s128 = scalar_select %p127, %s126, 0
    %s129 = smul.addr %s128, 8
    %s130 = scalar_lea.vmem %s8, %s129
    %s131 = sadd.s32 0, 0
    %p132 = scmp.eq.s32.totalorder 0, 0
    // Predicated region
    $region58: #{modulator_forward.1} parent=1 // pred_check
      %p133 = pneg %p132
    $region59: #{modulator_forward.1} parent=1 // pred_check_branch
      %135 = sbr.rel (%p133) target = $region61
    $region60: #{modulator_forward.1} parent=1 // pred_region
      %136 = vst [vmem:[%s9] sm:$0xff] 0.0
      %137 = vst [vmem:[%s10] sm:$0xff] 0.0
    $region61: #{modulator_forward.1} parent=1 // pred_fallthru
      _
    %s138 = sld [smem:[#allocation3]]
    %s139 = sld [smem:[#allocation3 + $0x1]]
    %s140 = sld [smem:[#allocation3 + $0x2]]
    %s141 = sld [smem:[#allocation3 + $0x3]]
    %s142 = sld [smem:[#allocation3 + $0x4]]
    %s143 = sld [smem:[#allocation3 + $0x5]]
    %s144 = sld [smem:[#allocation3 + $0x6]]
    %s145 = sld [smem:[#allocation3 + $0x7]]
    %s146 = sld [smem:[#allocation3 + $0x8]]
    %s147 = sld [smem:[#allocation3 + $0x9]]
    %s148 = sld [smem:[#allocation3 + $0xa]]
    %s149 = sld [smem:[#allocation3 + $0xb]]
    %s150 = sld [smem:[#allocation3 + $0xc]]
    %s151 = sld [smem:[#allocation3 + $0xd]]
    %s152 = sld [smem:[#allocation3 + $0xe]]
    %s153 = sld [smem:[#allocation3 + $0xf]]
    %s154 = sld [smem:[#allocation3 + $0x10]]
    %s155 = sld [smem:[#allocation3 + $0x11]]
    %s156 = sld [smem:[#allocation3 + $0x12]]
    %s157 = sld [smem:[#allocation3 + $0x13]]
    %s158 = sld [smem:[#allocation5]]
    %s159 = sld [smem:[#allocation5 + $0x1]]
    %s160 = sld [smem:[#allocation5 + $0x2]]
    %s161 = sld [smem:[#allocation5 + $0x3]]
    %s162 = sld [smem:[#allocation5 + $0x4]]
    %s163 = sld [smem:[#allocation5 + $0x5]]
    %s164 = sld [smem:[#allocation5 + $0x6]]
    %s165 = sld [smem:[#allocation5 + $0x7]]
    %s166 = sld [smem:[#allocation5 + $0x8]]
    %s167 = sld [smem:[#allocation5 + $0x9]]
    %s168 = sld [smem:[#allocation7]]
    %s169 = sld [smem:[#allocation7 + $0x1]]
    %s170 = sld [smem:[#allocation7 + $0x2]]
    %s171 = sld [smem:[#allocation7 + $0x3]]
    %s172 = sld [smem:[#allocation7 + $0x4]]
    %s173 = sld [smem:[#allocation7 + $0x5]]
    %s174 = sld [smem:[#allocation7 + $0x6]]
    %s175 = sld [smem:[#allocation7 + $0x7]]
    %s176 = sld [smem:[#allocation7 + $0x8]]
    %s177 = sld [smem:[#allocation7 + $0x9]]
    %s178 = sld [smem:[#allocation7 + $0xa]]
    %s179 = sld [smem:[#allocation7 + $0xb]]
    %s180 = sld [smem:[#allocation7 + $0xc]]
    %s181 = sld [smem:[#allocation7 + $0xd]]
    %s182 = sld [smem:[#allocation7 + $0xe]]
    %s183 = sld [smem:[#allocation7 + $0xf]]
    %s184 = sld [smem:[#allocation7 + $0x10]]
    %s185 = sld [smem:[#allocation7 + $0x11]]
    %s186 = sld [smem:[#allocation7 + $0x12]]
    %s187 = sld [smem:[#allocation7 + $0x13]]
    %s188 = sld [smem:[#allocation7 + $0x14]]
    %s189 = sld [smem:[#allocation7 + $0x15]]
    %s190 = sld [smem:[#allocation7 + $0x16]]
    %s191 = sld [smem:[#allocation7 + $0x17]]
    %s192 = sld [smem:[#allocation7 + $0x18]]
    %s193 = sld [smem:[#allocation7 + $0x19]]
    %s194 = sld [smem:[#allocation7 + $0x1a]]
    %s195 = sld [smem:[#allocation7 + $0x1b]]
    %s196 = sld [smem:[#allocation7 + $0x1c]]
    %s197 = sld [smem:[#allocation7 + $0x1d]]
    %s198 = sld [smem:[#allocation7 + $0x1e]]
    %s199 = sld [smem:[#allocation7 + $0x1f]]
    %s200 = sld [smem:[#allocation7 + $0x20]]
    %s201 = sld [smem:[#allocation7 + $0x21]]
    %s202 = sld [smem:[#allocation7 + $0x22]]
    %s203 = sld [smem:[#allocation7 + $0x23]]
    %s204 = sld [smem:[#allocation7 + $0x24]]
    %s205 = sld [smem:[#allocation7 + $0x25]]
    %s206 = sld [smem:[#allocation7 + $0x26]]
    %s207 = sld [smem:[#allocation7 + $0x27]]
    %s208 = sld [smem:[#allocation7 + $0x28]]
    %s209 = sld [smem:[#allocation7 + $0x29]]
    %s210 = sld [smem:[#allocation7 + $0x2a]]
    %s211 = sld [smem:[#allocation7 + $0x2b]]
    %s212 = sld [smem:[#allocation7 + $0x2c]]
    %s213 = sld [smem:[#allocation7 + $0x2d]]
    %s214 = sld [smem:[#allocation7 + $0x2e]]
    %s215 = sld [smem:[#allocation7 + $0x2f]]
    %s216 = sld [smem:[#allocation7 + $0x30]]
    %s217 = sld [smem:[#allocation7 + $0x31]]
    %s218 = sld [smem:[#allocation7 + $0x32]]
    %s219 = sld [smem:[#allocation7 + $0x33]]
    %s220 = sld [smem:[#allocation7 + $0x34]]
    %s221 = sld [smem:[#allocation7 + $0x35]]
    %s222 = sld [smem:[#allocation7 + $0x36]]
    %s223 = sld [smem:[#allocation7 + $0x37]]
    %s224 = sld [smem:[#allocation7 + $0x38]]
    %s225 = sld [smem:[#allocation7 + $0x39]]
    %s226 = sld [smem:[#allocation7 + $0x3a]]
    %s227 = sld [smem:[#allocation7 + $0x3b]]
    %s228 = sld [smem:[#allocation7 + $0x3c]]
    %s229 = sld [smem:[#allocation7 + $0x3d]]
    %s230 = sld [smem:[#allocation7 + $0x3e]]
    %s231 = sld [smem:[#allocation7 + $0x3f]]
    %s232 = sld [smem:[#allocation7 + $0x40]]
    %s233 = sld [smem:[#allocation7 + $0x41]]
    %s234 = sld [smem:[#allocation7 + $0x42]]
    %s235 = sld [smem:[#allocation7 + $0x43]]
    %s236 = sld [smem:[#allocation7 + $0x44]]
    %s237 = sld [smem:[#allocation7 + $0x45]]
    %s238 = sld [smem:[#allocation7 + $0x46]]
    %s239 = sld [smem:[#allocation7 + $0x47]]
    %s240 = sld [smem:[#allocation7 + $0x48]]
    %s241 = sld [smem:[#allocation7 + $0x49]]
    %s242 = sld [smem:[#allocation7 + $0x4a]]
    %s243 = sld [smem:[#allocation7 + $0x4b]]
    %s244 = sld [smem:[#allocation7 + $0x4c]]
    %s245 = sld [smem:[#allocation7 + $0x4d]]
    %s246 = sld [smem:[#allocation7 + $0x4e]]
    %s247 = sld [smem:[#allocation7 + $0x4f]]
    %s248 = sld [smem:[#allocation7 + $0x50]]
    %s249 = sld [smem:[#allocation7 + $0x51]]
    %s250 = sld [smem:[#allocation7 + $0x52]]
    %s251 = sld [smem:[#allocation7 + $0x53]]
    %s252 = sld [smem:[#allocation7 + $0x54]]
    %s253 = sld [smem:[#allocation7 + $0x55]]
    %s254 = sld [smem:[#allocation7 + $0x56]]
    %s255 = sld [smem:[#allocation7 + $0x57]]
    %s256 = sld [smem:[#allocation7 + $0x58]]
    %s257 = sld [smem:[#allocation7 + $0x59]]
    %s258 = sld [smem:[#allocation7 + $0x5a]]
    %s259 = sld [smem:[#allocation7 + $0x5b]]
    %s260 = sld [smem:[#allocation7 + $0x5c]]
    %s261 = sld [smem:[#allocation7 + $0x5d]]
    %s262 = sld [smem:[#allocation7 + $0x5e]]
    %s263 = sld [smem:[#allocation7 + $0x5f]]
    %s264 = sld [smem:[#allocation7 + $0x60]]
    %s265 = sld [smem:[#allocation7 + $0x61]]
    %s266 = sld [smem:[#allocation7 + $0x62]]
    %s267 = sld [smem:[#allocation7 + $0x63]]
    %s268 = sld [smem:[#allocation8]]
    %s269 = sld [smem:[#allocation8 + $0x1]]
    %s270 = sld [smem:[#allocation8 + $0x2]]
    %s271 = sld [smem:[#allocation8 + $0x3]]
    %s272 = sld [smem:[#allocation8 + $0x4]]
    %s273 = sld [smem:[#allocation8 + $0x5]]
    %s274 = sld [smem:[#allocation8 + $0x6]]
    %s275 = sld [smem:[#allocation8 + $0x7]]
    %s276 = sld [smem:[#allocation8 + $0x8]]
    %s277 = sld [smem:[#allocation8 + $0x9]]
    %s278 = sld [smem:[#allocation10]]
    %s279 = sld [smem:[#allocation10 + $0x1]]
    %s280 = sld [smem:[#allocation10 + $0x2]]
    %s281 = sld [smem:[#allocation10 + $0x3]]
    %s282 = sld [smem:[#allocation10 + $0x4]]
    %s283 = sld [smem:[#allocation10 + $0x5]]
    %s284 = sld [smem:[#allocation10 + $0x6]]
    %s285 = sld [smem:[#allocation10 + $0x7]]
    %s286 = sld [smem:[#allocation10 + $0x8]]
    %s287 = sld [smem:[#allocation10 + $0x9]]
    %s288 = sld [smem:[#allocation10 + $0xa]]
    %s289 = sld [smem:[#allocation10 + $0xb]]
    %s290 = sld [smem:[#allocation10 + $0xc]]
    %s291 = sld [smem:[#allocation10 + $0xd]]
    %s292 = sld [smem:[#allocation10 + $0xe]]
    %s293 = sld [smem:[#allocation10 + $0xf]]
    %s294 = sld [smem:[#allocation10 + $0x10]]
    %s295 = sld [smem:[#allocation10 + $0x11]]
    %s296 = sld [smem:[#allocation10 + $0x12]]
    %s297 = sld [smem:[#allocation10 + $0x13]]
    %s298 = sld [smem:[#allocation11]]
    %s299 = sld [smem:[#allocation11 + $0x1]]
    %v300 = vld [vmem:[%s124] sm:$0xff]
    %s301 = scalar_lea.vmem %s124, 8
    %v302 = vld [vmem:[%s301] sm:$0xff]
    %v303 = vstv %s138
    %v304 = vmul.f32 %v300, %v303
    %v305 = vstv %s148
    %v306 = vmul.f32 %v302, %v305
    %v307 = vadd.f32 %v304, %v306
    %v308 = vstv %s158
    %v309 = vadd.f32 %v307, %v308
    %vm310 = vcmp.gt.f32.partialorder %v309, 0.0
    %v311 = vmul.f32 %v309, 1.442695
    %v312 = vpow.pop %v311
    %v313 = vsub.f32 %v312, 1.0
    %v314 = vsel %vm310, %v309, %v313
    %v315 = vstv %s139
    %v316 = vmul.f32 %v300, %v315
    %v317 = vstv %s149
    %v318 = vmul.f32 %v302, %v317
    %v319 = vadd.f32 %v316, %v318
    %v320 = vstv %s159
    %v321 = vadd.f32 %v319, %v320
    %vm322 = vcmp.gt.f32.partialorder %v321, 0.0
    %v323 = vmul.f32 %v321, 1.442695
    %v324 = vpow.pop %v323
    %v325 = vsub.f32 %v324, 1.0
    %v326 = vsel %vm322, %v321, %v325
    %v327 = vstv %s140
    %v328 = vmul.f32 %v300, %v327
    %v329 = vstv %s150
    %v330 = vmul.f32 %v302, %v329
    %v331 = vadd.f32 %v328, %v330
    %v332 = vstv %s160
    %v333 = vadd.f32 %v331, %v332
    %vm334 = vcmp.gt.f32.partialorder %v333, 0.0
    %v335 = vmul.f32 %v333, 1.442695
    %v336 = vpow.pop %v335
    %v337 = vsub.f32 %v336, 1.0
    %v338 = vsel %vm334, %v333, %v337
    %v339 = vstv %s141
    %v340 = vmul.f32 %v300, %v339
    %v341 = vstv %s151
    %v342 = vmul.f32 %v302, %v341
    %v343 = vadd.f32 %v340, %v342
    %v344 = vstv %s161
    %v345 = vadd.f32 %v343, %v344
    %vm346 = vcmp.gt.f32.partialorder %v345, 0.0
    %v347 = vmul.f32 %v345, 1.442695
    %v348 = vpow.pop %v347
    %v349 = vsub.f32 %v348, 1.0
    %v350 = vsel %vm346, %v345, %v349
    %v351 = vstv %s142
    %v352 = vmul.f32 %v300, %v351
    %v353 = vstv %s152
    %v354 = vmul.f32 %v302, %v353
    %v355 = vadd.f32 %v352, %v354
    %v356 = vstv %s162
    %v357 = vadd.f32 %v355, %v356
    %vm358 = vcmp.gt.f32.partialorder %v357, 0.0
    %v359 = vmul.f32 %v357, 1.442695
    %v360 = vpow.pop %v359
    %v361 = vsub.f32 %v360, 1.0
    %v362 = vsel %vm358, %v357, %v361
    %v363 = vstv %s143
    %v364 = vmul.f32 %v300, %v363
    %v365 = vstv %s153
    %v366 = vmul.f32 %v302, %v365
    %v367 = vadd.f32 %v364, %v366
    %v368 = vstv %s163
    %v369 = vadd.f32 %v367, %v368
    %vm370 = vcmp.gt.f32.partialorder %v369, 0.0
    %v371 = vmul.f32 %v369, 1.442695
    %v372 = vpow.pop %v371
    %v373 = vsub.f32 %v372, 1.0
    %v374 = vsel %vm370, %v369, %v373
    %v375 = vstv %s144
    %v376 = vmul.f32 %v300, %v375
    %v377 = vstv %s154
    %v378 = vmul.f32 %v302, %v377
    %v379 = vadd.f32 %v376, %v378
    %v380 = vstv %s164
    %v381 = vadd.f32 %v379, %v380
    %vm382 = vcmp.gt.f32.partialorder %v381, 0.0
    %v383 = vmul.f32 %v381, 1.442695
    %v384 = vpow.pop %v383
    %v385 = vsub.f32 %v384, 1.0
    %v386 = vsel %vm382, %v381, %v385
    %v387 = vstv %s145
    %v388 = vmul.f32 %v300, %v387
    %v389 = vstv %s155
    %v390 = vmul.f32 %v302, %v389
    %v391 = vadd.f32 %v388, %v390
    %v392 = vstv %s165
    %v393 = vadd.f32 %v391, %v392
    %vm394 = vcmp.gt.f32.partialorder %v393, 0.0
    %v395 = vmul.f32 %v393, 1.442695
    %v396 = vpow.pop %v395
    %v397 = vsub.f32 %v396, 1.0
    %v398 = vsel %vm394, %v393, %v397
    %v399 = vstv %s146
    %v400 = vmul.f32 %v300, %v399
    %v401 = vstv %s156
    %v402 = vmul.f32 %v302, %v401
    %v403 = vadd.f32 %v400, %v402
    %v404 = vstv %s166
    %v405 = vadd.f32 %v403, %v404
    %vm406 = vcmp.gt.f32.partialorder %v405, 0.0
    %v407 = vmul.f32 %v405, 1.442695
    %v408 = vpow.pop %v407
    %v409 = vsub.f32 %v408, 1.0
    %v410 = vsel %vm406, %v405, %v409
    %v411 = vstv %s147
    %v412 = vmul.f32 %v300, %v411
    %v413 = vstv %s157
    %v414 = vmul.f32 %v302, %v413
    %v415 = vadd.f32 %v412, %v414
    %v416 = vstv %s167
    %v417 = vadd.f32 %v415, %v416
    %vm418 = vcmp.gt.f32.partialorder %v417, 0.0
    %v419 = vmul.f32 %v417, 1.442695
    %v420 = vpow.pop %v419
    %v421 = vsub.f32 %v420, 1.0
    %v422 = vsel %vm418, %v417, %v421
    %v423 = vstv %s168
    %v424 = vmul.f32 %v314, %v423
    %v425 = vstv %s178
    %v426 = vmul.f32 %v326, %v425
    %v427 = vadd.f32 %v424, %v426
    %v428 = vstv %s188
    %v429 = vmul.f32 %v338, %v428
    %v430 = vadd.f32 %v427, %v429
    %v431 = vstv %s198
    %v432 = vmul.f32 %v350, %v431
    %v433 = vadd.f32 %v430, %v432
    %v434 = vstv %s208
    %v435 = vmul.f32 %v362, %v434
    %v436 = vadd.f32 %v433, %v435
    %v437 = vstv %s218
    %v438 = vmul.f32 %v374, %v437
    %v439 = vadd.f32 %v436, %v438
    %v440 = vstv %s228
    %v441 = vmul.f32 %v386, %v440
    %v442 = vadd.f32 %v439, %v441
    %v443 = vstv %s238
    %v444 = vmul.f32 %v398, %v443
    %v445 = vadd.f32 %v442, %v444
    %v446 = vstv %s248
    %v447 = vmul.f32 %v410, %v446
    %v448 = vadd.f32 %v445, %v447
    %v449 = vstv %s258
    %v450 = vmul.f32 %v422, %v449
    %v451 = vadd.f32 %v448, %v450
    %v452 = vstv %s268
    %v453 = vadd.f32 %v451, %v452
    %vm454 = vcmp.gt.f32.partialorder %v453, 0.0
    %v455 = vmul.f32 %v453, 1.442695
    %v456 = vpow.pop %v455
    %v457 = vsub.f32 %v456, 1.0
    %v458 = vsel %vm454, %v453, %v457
    %v459 = vstv %s169
    %v460 = vmul.f32 %v314, %v459
    %v461 = vstv %s179
    %v462 = vmul.f32 %v326, %v461
    %v463 = vadd.f32 %v460, %v462
    %v464 = vstv %s189
    %v465 = vmul.f32 %v338, %v464
    %v466 = vadd.f32 %v463, %v465
    %v467 = vstv %s199
    %v468 = vmul.f32 %v350, %v467
    %v469 = vadd.f32 %v466, %v468
    %v470 = vstv %s209
    %v471 = vmul.f32 %v362, %v470
    %v472 = vadd.f32 %v469, %v471
    %v473 = vstv %s219
    %v474 = vmul.f32 %v374, %v473
    %v475 = vadd.f32 %v472, %v474
    %v476 = vstv %s229
    %v477 = vmul.f32 %v386, %v476
    %v478 = vadd.f32 %v475, %v477
    %v479 = vstv %s239
    %v480 = vmul.f32 %v398, %v479
    %v481 = vadd.f32 %v478, %v480
    %v482 = vstv %s249
    %v483 = vmul.f32 %v410, %v482
    %v484 = vadd.f32 %v481, %v483
    %v485 = vstv %s259
    %v486 = vmul.f32 %v422, %v485
    %v487 = vadd.f32 %v484, %v486
    %v488 = vstv %s269
    %v489 = vadd.f32 %v487, %v488
    %vm490 = vcmp.gt.f32.partialorder %v489, 0.0
    %v491 = vmul.f32 %v489, 1.442695
    %v492 = vpow.pop %v491
    %v493 = vsub.f32 %v492, 1.0
    %v494 = vsel %vm490, %v489, %v493
    %v495 = vstv %s170
    %v496 = vmul.f32 %v314, %v495
    %v497 = vstv %s180
    %v498 = vmul.f32 %v326, %v497
    %v499 = vadd.f32 %v496, %v498
    %v500 = vstv %s190
    %v501 = vmul.f32 %v338, %v500
    %v502 = vadd.f32 %v499, %v501
    %v503 = vstv %s200
    %v504 = vmul.f32 %v350, %v503
    %v505 = vadd.f32 %v502, %v504
    %v506 = vstv %s210
    %v507 = vmul.f32 %v362, %v506
    %v508 = vadd.f32 %v505, %v507
    %v509 = vstv %s220
    %v510 = vmul.f32 %v374, %v509
    %v511 = vadd.f32 %v508, %v510
    %v512 = vstv %s230
    %v513 = vmul.f32 %v386, %v512
    %v514 = vadd.f32 %v511, %v513
    %v515 = vstv %s240
    %v516 = vmul.f32 %v398, %v515
    %v517 = vadd.f32 %v514, %v516
    %v518 = vstv %s250
    %v519 = vmul.f32 %v410, %v518
    %v520 = vadd.f32 %v517, %v519
    %v521 = vstv %s260
    %v522 = vmul.f32 %v422, %v521
    %v523 = vadd.f32 %v520, %v522
    %v524 = vstv %s270
    %v525 = vadd.f32 %v523, %v524
    %vm526 = vcmp.gt.f32.partialorder %v525, 0.0
    %v527 = vmul.f32 %v525, 1.442695
    %v528 = vpow.pop %v527
    %v529 = vsub.f32 %v528, 1.0
    %v530 = vsel %vm526, %v525, %v529
    %v531 = vstv %s171
    %v532 = vmul.f32 %v314, %v531
    %v533 = vstv %s181
    %v534 = vmul.f32 %v326, %v533
    %v535 = vadd.f32 %v532, %v534
    %v536 = vstv %s191
    %v537 = vmul.f32 %v338, %v536
    %v538 = vadd.f32 %v535, %v537
    %v539 = vstv %s201
    %v540 = vmul.f32 %v350, %v539
    %v541 = vadd.f32 %v538, %v540
    %v542 = vstv %s211
    %v543 = vmul.f32 %v362, %v542
    %v544 = vadd.f32 %v541, %v543
    %v545 = vstv %s221
    %v546 = vmul.f32 %v374, %v545
    %v547 = vadd.f32 %v544, %v546
    %v548 = vstv %s231
    %v549 = vmul.f32 %v386, %v548
    %v550 = vadd.f32 %v547, %v549
    %v551 = vstv %s241
    %v552 = vmul.f32 %v398, %v551
    %v553 = vadd.f32 %v550, %v552
    %v554 = vstv %s251
    %v555 = vmul.f32 %v410, %v554
    %v556 = vadd.f32 %v553, %v555
    %v557 = vstv %s261
    %v558 = vmul.f32 %v422, %v557
    %v559 = vadd.f32 %v556, %v558
    %v560 = vstv %s271
    %v561 = vadd.f32 %v559, %v560
    %vm562 = vcmp.gt.f32.partialorder %v561, 0.0
    %v563 = vmul.f32 %v561, 1.442695
    %v564 = vpow.pop %v563
    %v565 = vsub.f32 %v564, 1.0
    %v566 = vsel %vm562, %v561, %v565
    %v567 = vstv %s172
    %v568 = vmul.f32 %v314, %v567
    %v569 = vstv %s182
    %v570 = vmul.f32 %v326, %v569
    %v571 = vadd.f32 %v568, %v570
    %v572 = vstv %s192
    %v573 = vmul.f32 %v338, %v572
    %v574 = vadd.f32 %v571, %v573
    %v575 = vstv %s202
    %v576 = vmul.f32 %v350, %v575
    %v577 = vadd.f32 %v574, %v576
    %v578 = vstv %s212
    %v579 = vmul.f32 %v362, %v578
    %v580 = vadd.f32 %v577, %v579
    %v581 = vstv %s222
    %v582 = vmul.f32 %v374, %v581
    %v583 = vadd.f32 %v580, %v582
    %v584 = vstv %s232
    %v585 = vmul.f32 %v386, %v584
    %v586 = vadd.f32 %v583, %v585
    %v587 = vstv %s242
    %v588 = vmul.f32 %v398, %v587
    %v589 = vadd.f32 %v586, %v588
    %v590 = vstv %s252
    %v591 = vmul.f32 %v410, %v590
    %v592 = vadd.f32 %v589, %v591
    %v593 = vstv %s262
    %v594 = vmul.f32 %v422, %v593
    %v595 = vadd.f32 %v592, %v594
    %v596 = vstv %s272
    %v597 = vadd.f32 %v595, %v596
    %vm598 = vcmp.gt.f32.partialorder %v597, 0.0
    %v599 = vmul.f32 %v597, 1.442695
    %v600 = vpow.pop %v599
    %v601 = vsub.f32 %v600, 1.0
    %v602 = vsel %vm598, %v597, %v601
    %v603 = vstv %s173
    %v604 = vmul.f32 %v314, %v603
    %v605 = vstv %s183
    %v606 = vmul.f32 %v326, %v605
    %v607 = vadd.f32 %v604, %v606
    %v608 = vstv %s193
    %v609 = vmul.f32 %v338, %v608
    %v610 = vadd.f32 %v607, %v609
    %v611 = vstv %s203
    %v612 = vmul.f32 %v350, %v611
    %v613 = vadd.f32 %v610, %v612
    %v614 = vstv %s213
    %v615 = vmul.f32 %v362, %v614
    %v616 = vadd.f32 %v613, %v615
    %v617 = vstv %s223
    %v618 = vmul.f32 %v374, %v617
    %v619 = vadd.f32 %v616, %v618
    %v620 = vstv %s233
    %v621 = vmul.f32 %v386, %v620
    %v622 = vadd.f32 %v619, %v621
    %v623 = vstv %s243
    %v624 = vmul.f32 %v398, %v623
    %v625 = vadd.f32 %v622, %v624
    %v626 = vstv %s253
    %v627 = vmul.f32 %v410, %v626
    %v628 = vadd.f32 %v625, %v627
    %v629 = vstv %s263
    %v630 = vmul.f32 %v422, %v629
    %v631 = vadd.f32 %v628, %v630
    %v632 = vstv %s273
    %v633 = vadd.f32 %v631, %v632
    %vm634 = vcmp.gt.f32.partialorder %v633, 0.0
    %v635 = vmul.f32 %v633, 1.442695
    %v636 = vpow.pop %v635
    %v637 = vsub.f32 %v636, 1.0
    %v638 = vsel %vm634, %v633, %v637
    %v639 = vstv %s174
    %v640 = vmul.f32 %v314, %v639
    %v641 = vstv %s184
    %v642 = vmul.f32 %v326, %v641
    %v643 = vadd.f32 %v640, %v642
    %v644 = vstv %s194
    %v645 = vmul.f32 %v338, %v644
    %v646 = vadd.f32 %v643, %v645
    %v647 = vstv %s204
    %v648 = vmul.f32 %v350, %v647
    %v649 = vadd.f32 %v646, %v648
    %v650 = vstv %s214
    %v651 = vmul.f32 %v362, %v650
    %v652 = vadd.f32 %v649, %v651
    %v653 = vstv %s224
    %v654 = vmul.f32 %v374, %v653
    %v655 = vadd.f32 %v652, %v654
    %v656 = vstv %s234
    %v657 = vmul.f32 %v386, %v656
    %v658 = vadd.f32 %v655, %v657
    %v659 = vstv %s244
    %v660 = vmul.f32 %v398, %v659
    %v661 = vadd.f32 %v658, %v660
    %v662 = vstv %s254
    %v663 = vmul.f32 %v410, %v662
    %v664 = vadd.f32 %v661, %v663
    %v665 = vstv %s264
    %v666 = vmul.f32 %v422, %v665
    %v667 = vadd.f32 %v664, %v666
    %v668 = vstv %s274
    %v669 = vadd.f32 %v667, %v668
    %vm670 = vcmp.gt.f32.partialorder %v669, 0.0
    %v671 = vmul.f32 %v669, 1.442695
    %v672 = vpow.pop %v671
    %v673 = vsub.f32 %v672, 1.0
    %v674 = vsel %vm670, %v669, %v673
    %v675 = vstv %s175
    %v676 = vmul.f32 %v314, %v675
    %v677 = vstv %s185
    %v678 = vmul.f32 %v326, %v677
    %v679 = vadd.f32 %v676, %v678
    %v680 = vstv %s195
    %v681 = vmul.f32 %v338, %v680
    %v682 = vadd.f32 %v679, %v681
    %v683 = vstv %s205
    %v684 = vmul.f32 %v350, %v683
    %v685 = vadd.f32 %v682, %v684
    %v686 = vstv %s215
    %v687 = vmul.f32 %v362, %v686
    %v688 = vadd.f32 %v685, %v687
    %v689 = vstv %s225
    %v690 = vmul.f32 %v374, %v689
    %v691 = vadd.f32 %v688, %v690
    %v692 = vstv %s235
    %v693 = vmul.f32 %v386, %v692
    %v694 = vadd.f32 %v691, %v693
    %v695 = vstv %s245
    %v696 = vmul.f32 %v398, %v695
    %v697 = vadd.f32 %v694, %v696
    %v698 = vstv %s255
    %v699 = vmul.f32 %v410, %v698
    %v700 = vadd.f32 %v697, %v699
    %v701 = vstv %s265
    %v702 = vmul.f32 %v422, %v701
    %v703 = vadd.f32 %v700, %v702
    %v704 = vstv %s275
    %v705 = vadd.f32 %v703, %v704
    %vm706 = vcmp.gt.f32.partialorder %v705, 0.0
    %v707 = vmul.f32 %v705, 1.442695
    %v708 = vpow.pop %v707
    %v709 = vsub.f32 %v708, 1.0
    %v710 = vsel %vm706, %v705, %v709
    %v711 = vstv %s176
    %v712 = vmul.f32 %v314, %v711
    %v713 = vstv %s186
    %v714 = vmul.f32 %v326, %v713
    %v715 = vadd.f32 %v712, %v714
    %v716 = vstv %s196
    %v717 = vmul.f32 %v338, %v716
    %v718 = vadd.f32 %v715, %v717
    %v719 = vstv %s206
    %v720 = vmul.f32 %v350, %v719
    %v721 = vadd.f32 %v718, %v720
    %v722 = vstv %s216
    %v723 = vmul.f32 %v362, %v722
    %v724 = vadd.f32 %v721, %v723
    %v725 = vstv %s226
    %v726 = vmul.f32 %v374, %v725
    %v727 = vadd.f32 %v724, %v726
    %v728 = vstv %s236
    %v729 = vmul.f32 %v386, %v728
    %v730 = vadd.f32 %v727, %v729
    %v731 = vstv %s246
    %v732 = vmul.f32 %v398, %v731
    %v733 = vadd.f32 %v730, %v732
    %v734 = vstv %s256
    %v735 = vmul.f32 %v410, %v734
    %v736 = vadd.f32 %v733, %v735
    %v737 = vstv %s266
    %v738 = vmul.f32 %v422, %v737
    %v739 = vadd.f32 %v736, %v738
    %v740 = vstv %s276
    %v741 = vadd.f32 %v739, %v740
    %vm742 = vcmp.gt.f32.partialorder %v741, 0.0
    %v743 = vmul.f32 %v741, 1.442695
    %v744 = vpow.pop %v743
    %v745 = vsub.f32 %v744, 1.0
    %v746 = vsel %vm742, %v741, %v745
    %v747 = vstv %s177
    %v748 = vmul.f32 %v314, %v747
    %v749 = vstv %s187
    %v750 = vmul.f32 %v326, %v749
    %v751 = vadd.f32 %v748, %v750
    %v752 = vstv %s197
    %v753 = vmul.f32 %v338, %v752
    %v754 = vadd.f32 %v751, %v753
    %v755 = vstv %s207
    %v756 = vmul.f32 %v350, %v755
    %v757 = vadd.f32 %v754, %v756
    %v758 = vstv %s217
    %v759 = vmul.f32 %v362, %v758
    %v760 = vadd.f32 %v757, %v759
    %v761 = vstv %s227
    %v762 = vmul.f32 %v374, %v761
    %v763 = vadd.f32 %v760, %v762
    %v764 = vstv %s237
    %v765 = vmul.f32 %v386, %v764
    %v766 = vadd.f32 %v763, %v765
    %v767 = vstv %s247
    %v768 = vmul.f32 %v398, %v767
    %v769 = vadd.f32 %v766, %v768
    %v770 = vstv %s257
    %v771 = vmul.f32 %v410, %v770
    %v772 = vadd.f32 %v769, %v771
    %v773 = vstv %s267
    %v774 = vmul.f32 %v422, %v773
    %v775 = vadd.f32 %v772, %v774
    %v776 = vstv %s277
    %v777 = vadd.f32 %v775, %v776
    %vm778 = vcmp.gt.f32.partialorder %v777, 0.0
    %v779 = vmul.f32 %v777, 1.442695
    %v780 = vpow.pop %v779
    %v781 = vsub.f32 %v780, 1.0
    %v782 = vsel %vm778, %v777, %v781
    %v783 = vstv %s278
    %v784 = vmul.f32 %v458, %v783
    %v785 = vstv %s280
    %v786 = vmul.f32 %v494, %v785
    %v787 = vadd.f32 %v784, %v786
    %v788 = vstv %s282
    %v789 = vmul.f32 %v530, %v788
    %v790 = vadd.f32 %v787, %v789
    %v791 = vstv %s284
    %v792 = vmul.f32 %v566, %v791
    %v793 = vadd.f32 %v790, %v792
    %v794 = vstv %s286
    %v795 = vmul.f32 %v602, %v794
    %v796 = vadd.f32 %v793, %v795
    %v797 = vstv %s288
    %v798 = vmul.f32 %v638, %v797
    %v799 = vadd.f32 %v796, %v798
    %v800 = vstv %s290
    %v801 = vmul.f32 %v674, %v800
    %v802 = vadd.f32 %v799, %v801
    %v803 = vstv %s292
    %v804 = vmul.f32 %v710, %v803
    %v805 = vadd.f32 %v802, %v804
    %v806 = vstv %s294
    %v807 = vmul.f32 %v746, %v806
    %v808 = vadd.f32 %v805, %v807
    %v809 = vstv %s296
    %v810 = vmul.f32 %v782, %v809
    %v811 = vadd.f32 %v808, %v810
    %v812 = vstv %s298
    %v813 = vadd.f32 %v811, %v812
    %vm814 = vcmp.gt.f32.partialorder %v813, 0.0
    %v815 = vmul.f32 %v813, 1.442695
    %v816 = vpow.pop %v815
    %v817 = vsub.f32 %v816, 1.0
    %v818 = vsel %vm814, %v813, %v817
    %v819 = vstv %s279
    %v820 = vmul.f32 %v458, %v819
    %v821 = vstv %s281
    %v822 = vmul.f32 %v494, %v821
    %v823 = vadd.f32 %v820, %v822
    %v824 = vstv %s283
    %v825 = vmul.f32 %v530, %v824
    %v826 = vadd.f32 %v823, %v825
    %v827 = vstv %s285
    %v828 = vmul.f32 %v566, %v827
    %v829 = vadd.f32 %v826, %v828
    %v830 = vstv %s287
    %v831 = vmul.f32 %v602, %v830
    %v832 = vadd.f32 %v829, %v831
    %v833 = vstv %s289
    %v834 = vmul.f32 %v638, %v833
    %v835 = vadd.f32 %v832, %v834
    %v836 = vstv %s291
    %v837 = vmul.f32 %v674, %v836
    %v838 = vadd.f32 %v835, %v837
    %v839 = vstv %s293
    %v840 = vmul.f32 %v710, %v839
    %v841 = vadd.f32 %v838, %v840
    %v842 = vstv %s295
    %v843 = vmul.f32 %v746, %v842
    %v844 = vadd.f32 %v841, %v843
    %v845 = vstv %s297
    %v846 = vmul.f32 %v782, %v845
    %v847 = vadd.f32 %v844, %v846
    %v848 = vstv %s299
    %v849 = vadd.f32 %v847, %v848
    %vm850 = vcmp.gt.f32.partialorder %v849, 0.0
    %v851 = vmul.f32 %v849, 1.442695
    %v852 = vpow.pop %v851
    %v853 = vsub.f32 %v852, 1.0
    %v854 = vsel %vm850, %v849, %v853
    %855 = vst [vmem:[%s130] sm:$0xff] %v818
    %s856 = scalar_lea.vmem %s130, 8
    %857 = vst [vmem:[%s856] sm:$0xff] %v854
    %s858 = sadd.s32 0, 0
    %s859 = smul.u32 %s858, 1024
    %v860 = vlaneseq
    %v861 = vshrl.u32 %v860, 7
    %v862 = vlaneseq
    %v863 = vand.u32 %v862, 127
    %v864 = vmul.u32 %v861, 128
    %v865 = vstv %s859
    %v866 = vadd.s32 %v865, %v864
    %v867 = vadd.s32 %v866, %v863
    %s868 = sld [smem:[#allocation2]]
    %v869 = vstv %s868
    %vm870 = vcmp.lt.s32.totalorder %v867, %v869
    %v871 = vld [vmem:[%s9] sm:$0xff]
    %v872 = vadd.f32 %v818, %v854
    %v873 = vsel %vm870, %v872, 0.0
    %v874 = vadd.f32 %v871, %v873
    %875 = vst [vmem:[%s9] sm:$0xff] %v874
    %v876 = vld [vmem:[%s10] sm:$0xff]
    %v877 = vmul.f32 %v818, %v818
    %v878 = vmul.f32 %v854, %v854
    %v879 = vadd.f32 %v877, %v878
    %v880 = vsel %vm870, %v879, 0.0
    %v881 = vadd.f32 %v876, %v880
    %882 = vst [vmem:[%s10] sm:$0xff] %v881
    %s883 = sadd.s32 0, 0
    %p884 = scmp.lt.s32.totalorder %s883, 0
    %s885 = scalar_select %p884, %s883, 0
    %s886 = smul.addr %s885, 8
    %s887 = scalar_lea.vmem %s8, %s886
    // Predicated region
    $region62: #{modulator_forward.1} parent=1 // pred_check
      _
    $region63: #{modulator_forward.1} parent=1 // pred_check_branch
      %889 = sbr.rel (0) target = $region65
    $region64: #{modulator_forward.1} parent=1 // pred_region
      %s890 = sadd.s32 0, 0
    $region65: #{modulator_forward.1} parent=1 // pred_fallthru
      _
    // Predicated region
    $region66: #{modulator_forward.1} parent=1 // pred_check
      _
    $region67: #{modulator_forward.1} parent=1 // pred_check_branch
      %892 = sbr.rel (0) target = $region69
    $region68: #{modulator_forward.1} parent=1 // pred_region
      _
    $region69: #{modulator_forward.1} parent=1 // pred_fallthru
      _
    // Predicated region
    $region70: #{modulator_forward.1} parent=1 // pred_check
      _
    $region71: #{modulator_forward.1} parent=1 // pred_check_branch
      %894 = sbr.rel (0) target = $region73
    $region72: #{modulator_forward.1} parent=1 // pred_region
      _
    $region73: #{modulator_forward.1} parent=1 // pred_fallthru
      _
    // Predicated region
    $region74: #{modulator_forward.1} parent=1 // pred_check
      _
    $region75: #{modulator_forward.1} parent=1 // pred_check_branch
      %896 = sbr.rel (0) target = $region77
    $region76: #{modulator_forward.1} parent=1 // pred_region
      %s897 = sadd.s32 0, 0
      %p898 = scmp.lt.s32.totalorder %s897, 0
      %s899 = scalar_select %p898, %s897, 0
      %s900 = smul.addr %s899, 8
      %s901 = scalar_lea.vmem %s8, %s900
    $region77: #{modulator_forward.1} parent=1 // pred_fallthru
      _
    // Predicated region
    $region78: #{modulator_forward.1} parent=1 // pred_check
      _
    $region79: #{modulator_forward.1} parent=1 // pred_check_branch
      %903 = sbr.rel (0) target = $region81
    $region80: #{modulator_forward.1} parent=1 // pred_region
      _
    $region81: #{modulator_forward.1} parent=1 // pred_fallthru
      _
    // Predicated region
    $region82: #{modulator_forward.1} parent=1 // pred_check
      _
    $region83: #{modulator_forward.1} parent=1 // pred_check_branch
      %905 = sbr.rel (0) target = $region85
    $region84: #{modulator_forward.1} parent=1 // pred_region
      _
    $region85: #{modulator_forward.1} parent=1 // pred_fallthru
      _
    %906 = vsyncpa [#allocation4], 1
    %907 = vsyncpa [#allocation6], 1
    %908 = vsyncpa [#allocation9], 1
    %909 = vsyncpa [#allocation12], 1

</llo_original>
